<compile_context>
chip_gen: v5e
topology: v5e:2x2
jax: 0.10.0
libtpu: 0.0.40
codegen_flags: <defaults>
</compile_context>

<pallas_src>
import functools

import jax
import jax.numpy as jnp
from jax.experimental import pallas as pl
from jax.experimental.pallas import tpu as pltpu

EPS = 1e-5          # nn.BatchNorm3d default eps
LANE = 128          # TPU lane width


def _round_up(x, m):
    return (x + m - 1) // m * m


# --------------------------------------------------------------------------- #
# VMEM budgeting (generation-aware)
# --------------------------------------------------------------------------- #
def _nbytes(shape, dtype):
    n = 1
    for s in shape:
        n *= int(s)
    return n * jnp.dtype(dtype).itemsize


def _vmem_cap_bytes():
    """Usable per-core VMEM budget with headroom for Mosaic scratch/semaphores."""
    cap = 0
    try:
        cap = int(getattr(pltpu.get_tpu_info(), "vmem_capacity_bytes", 0))
    except Exception:
        cap = 0
    if cap <= 0:
        cap = 64 * 1024 * 1024      # conservative: v7x has the smallest VMEM/TC
    # ~25% headroom: ~48 MiB on v7x (64 MiB), ~96 MiB on v5e/v6e (128 MiB).
    return cap - max(8 * 1024 * 1024, cap // 4)


def _vmem_limit_bytes(pipelined_blocks, scratch=()):
    """Estimate per-step VMEM (double-buffered blocks + scratch), pick a limit."""
    cap = _vmem_cap_bytes()
    est = sum(2 * _nbytes(s, d) for s, d in pipelined_blocks)
    est += sum(_nbytes(s, d) for s, d in scratch)
    if est > cap:
        # TODO(synk): tile the H axis (2-row halo) so a full (b, d) plane no
        # longer has to fit in VMEM on small-VMEM parts (v7x).
        raise ValueError(
            f"per-step working set {est >> 20} MiB exceeds the VMEM budget "
            f"{cap >> 20} MiB")
    return int(min(cap, max(16 * 1024 * 1024, 2 * est)))


# --------------------------------------------------------------------------- #
# Kernels
# --------------------------------------------------------------------------- #
def _plane_stats(acc, inv_n):
    """Per-plane [sum, mean-centered m2] from the f32 accumulator.

    Mean-centered m2 (instead of sum of squares) avoids the E[x^2]-E[x]^2
    cancellation when the wrapper combines planes (Chan's formula). Returned
    as one (2, N) slab so the epilogue does a single unmasked store.
    """
    s = jnp.sum(acc, axis=0, keepdims=True)                 # (1, N)
    d = acc - s * inv_n
    m2 = jnp.sum(d * d, axis=0, keepdims=True)              # (1, N)
    return jnp.concatenate([s, m2], axis=0)                 # (2, N)


def _conv1x1_stats_kernel(x_ref, w_ref, b_ref, raw_ref, stats_ref, *, inv_n):
    """1x1x1 conv (+bias) on one (b, d) plane + per-plane BN partial stats."""
    acc = jnp.dot(x_ref[...], w_ref[...], preferred_element_type=jnp.float32)
    acc = acc + b_ref[...]
    raw_ref[...] = acc.astype(raw_ref.dtype)                # bf16 store, f32 stats
    stats_ref[...] = _plane_stats(acc, inv_n)


def _conv3x3x3_stats_kernel(xw_ref, w_ref, raw_ref, stats_ref, acc_ref, *,
                            n_rows, row_stride, inv_n):
    """One kd tap of a 3x3x3 conv for one (b, d) output plane.

    Grid = (B, D, 3); dz = program_id(2) is the depth-tap reduction axis.
    xw_ref : (Hp*W, 3*C_in)  width-unfolded padded plane at depth d + dz
    w_ref  : (27*C_in, C_out) full weight slab (constant block index; resident)
    raw_ref: (H*W, C_out) bf16 conv output (written on the last dz)
    stats_ref: (2, C_out) f32 [sum, m2] partials over this plane
    acc_ref: (H*W, C_out) f32 scratch accumulator (resident across dz).  The
             f32 scratch is kept (vs. accumulating into raw_ref) because raw
             is stored in bf16; accumulation must stay f32.
    """
    dz = pl.program_id(2)

    @pl.when(dz == 0)
    def _():
        acc_ref[...] = jnp.zeros_like(acc_ref)

    c3 = xw_ref.shape[-1]             # = 3 * C_in  (kw x C_in block per kh tap)
    contrib = None
    for dy in range(3):               # kh taps: row-shifted contiguous slices
        rows = xw_ref[pl.ds(dy * row_stride, n_rows), :]
        wstart = pl.multiple_of((dz * 3 + dy) * c3, 8)
        taps = w_ref[pl.ds(wstart, c3), :]
        part = jnp.dot(rows, taps, preferred_element_type=jnp.float32)
        contrib = part if contrib is None else contrib + part
    acc_ref[...] += contrib

    @pl.when(dz == pl.num_programs(2) - 1)
    def _():
        acc = acc_ref[...]
        raw_ref[...] = acc.astype(raw_ref.dtype)
        stats_ref[...] = _plane_stats(acc, inv_n)


def _bn_residual_relu_kernel(raw3_ref, raw1_ref, p_ref, o_ref):
    """out = ReLU(raw3*s3 + t3 + ReLU(raw1*s1 + t1)) for one (b, d) plane.

    The residual (post-BN1+ReLU of the bottleneck) is re-derived from raw1
    here, so it never has to be written to HBM by a separate pass.
    """
    p = p_ref[...]                                    # (4, N): s3, t3, s1, t1
    res = jnp.maximum(raw1_ref[...].astype(jnp.float32) * p[0:1, :] * 0.0
                      + raw1_ref[...].astype(jnp.float32) * p[2:3, :] + p[3:4, :],
                      0.0)
    y = raw3_ref[...].astype(jnp.float32) * p[0:1, :] + p[1:2, :] + res
    o_ref[...] = jnp.maximum(y, 0.0).astype(o_ref.dtype)


# --------------------------------------------------------------------------- #
# Wrappers around pallas_call
# --------------------------------------------------------------------------- #
def _conv1x1_stats(x4, w, bias):
    """x4: [B, D, R, C_in] -> raw [B,D,R,N] (compute dtype), stats [B,D,2,N] f32."""
    B, D, R, Cin = x4.shape
    N = w.shape[1]
    limit = _vmem_limit_bytes([
        ((R, Cin), x4.dtype), ((Cin, N), w.dtype), ((1, N), jnp.float32),
        ((R, N), x4.dtype), ((2, N), jnp.float32)])
    kernel = functools.partial(_conv1x1_stats_kernel, inv_n=1.0 / R)
    raw, stats = pl.pallas_call(
        kernel,
        grid_spec=pltpu.PrefetchScalarGridSpec(
            num_scalar_prefetch=0,
            grid=(B, D),
            in_specs=[
                pl.BlockSpec((None, None, R, Cin), lambda b, d: (b, d, 0, 0)),
                pl.BlockSpec((Cin, N), lambda b, d: (0, 0)),
                pl.BlockSpec((1, N), lambda b, d: (0, 0)),
            ],
            out_specs=[
                pl.BlockSpec((None, None, R, N), lambda b, d: (b, d, 0, 0)),
                pl.BlockSpec((None, None, 2, N), lambda b, d: (b, d, 0, 0)),
            ]),
        out_shape=[
            jax.ShapeDtypeStruct((B, D, R, N), x4.dtype),
            jax.ShapeDtypeStruct((B, D, 2, N), jnp.float32),
        ],
        compiler_params=pltpu.CompilerParams(
            dimension_semantics=("parallel", "parallel"),
            vmem_limit_bytes=limit),
    )(x4, w, bias)
    return raw, stats


def _conv3x3_stats(xw, wt, H, W, out_dtype):
    """3x3x3 conv, stride 1, pad 1, no bias, on a kw-unfolded padded input.

    xw: [B, D+2, (H+2)*W, 3*C] (compute dtype), wt: [27*C, N] (compute dtype).
    Returns raw [B, D, H*W, N] (out_dtype) and per-(b,d) stats [B, D, 2, N] f32.
    """
    B, Dp, RW, C3 = xw.shape
    D, R, N = Dp - 2, H * W, wt.shape[1]

    kernel = functools.partial(_conv3x3x3_stats_kernel,
                               n_rows=R, row_stride=W, inv_n=1.0 / R)
    limit = _vmem_limit_bytes(
        [((RW, C3), xw.dtype), (tuple(wt.shape), wt.dtype),
         ((R, N), out_dtype), ((2, N), jnp.float32)],
        scratch=[((R, N), jnp.float32)])

    raw, stats = pl.pallas_call(
        kernel,
        grid_spec=pltpu.PrefetchScalarGridSpec(
            num_scalar_prefetch=0,
            grid=(B, D, 3),
            in_specs=[
                pl.BlockSpec((None, None, RW, C3),
                             lambda b, d, dz: (b, d + dz, 0, 0)),
                # Constant block index: the whole 27C x N weight slab is DMA'd
                # once and stays resident in VMEM across the entire grid.
                pl.BlockSpec(tuple(wt.shape), lambda b, d, dz: (0, 0)),
            ],
            out_specs=[
                pl.BlockSpec((None, None, R, N), lambda b, d, dz: (b, d, 0, 0)),
                pl.BlockSpec((None, None, 2, N), lambda b, d, dz: (b, d, 0, 0)),
            ],
            scratch_shapes=[pltpu.VMEM((R, N), jnp.float32)]),
        out_shape=[
            jax.ShapeDtypeStruct((B, D, R, N), out_dtype),
            jax.ShapeDtypeStruct((B, D, 2, N), jnp.float32),
        ],
        compiler_params=pltpu.CompilerParams(
            dimension_semantics=("parallel", "parallel", "arbitrary"),
            vmem_limit_bytes=limit),
    )(xw, wt)
    return raw, stats


def _bn_residual_relu(raw3, raw1, params4, out_dtype):
    """Fused BN3-apply + residual (re-derived from raw1) + ReLU + store."""
    B, D, R, N = raw3.shape
    limit = _vmem_limit_bytes([((R, N), raw3.dtype), ((R, N), raw1.dtype),
                               ((4, N), jnp.float32), ((R, N), out_dtype)])
    # TODO(synk): alias raw3's buffer via input_output_aliases once the module
    # output dtype matches raw3's.
    return pl.pallas_call(
        _bn_residual_relu_kernel,
        grid_spec=pltpu.PrefetchScalarGridSpec(
            num_scalar_prefetch=0,
            grid=(B, D),
            in_specs=[
                pl.BlockSpec((None, None, R, N), lambda b, d: (b, d, 0, 0)),
                pl.BlockSpec((None, None, R, N), lambda b, d: (b, d, 0, 0)),
                pl.BlockSpec((4, N), lambda b, d: (0, 0)),
            ],
            out_specs=pl.BlockSpec((None, None, R, N), lambda b, d: (b, d, 0, 0))),
        out_shape=jax.ShapeDtypeStruct((B, D, R, N), out_dtype),
        compiler_params=pltpu.CompilerParams(
            dimension_semantics=("parallel", "parallel"),
            vmem_limit_bytes=limit),
    )(raw3, raw1, params4)


# --------------------------------------------------------------------------- #
# BN finalize (Chan combine) and input/weight plumbing
# --------------------------------------------------------------------------- #
def _bn_scale_shift(stats, gamma, beta, n_per_plane):
    """Training-mode BN scale/shift from per-plane [sum, m2] partials."""
    N = stats.shape[-1]
    sums = stats[:, :, 0, :].reshape(-1, N).astype(jnp.float32)
    m2s = stats[:, :, 1, :].reshape(-1, N).astype(jnp.float32)
    groups = sums.shape[0]
    m = groups * n_per_plane
    mean = jnp.sum(sums, axis=0) / m
    dmean = sums / n_per_plane - mean
    var = (jnp.sum(m2s, axis=0) + n_per_plane * jnp.sum(dmean * dmean, axis=0)) / m
    inv = jax.lax.rsqrt(jnp.maximum(var, 0.0) + EPS)        # biased var, as PyTorch
    scale = gamma.astype(jnp.float32) * inv
    shift = beta.astype(jnp.float32) - mean * scale
    return scale, shift


def _post_bn_kw_unfold(raw, scale, shift, H, W, compute_dtype):
    """relu(raw*scale + shift) -> zero-pad D/H/W by 1 -> unfold kw into channels.

    The BN affine + ReLU + bf16 cast are expressed inline so XLA fuses them
    into the unfold producer: the post-BN activation (the former `residual` /
    `h` intermediates) never materializes as a standalone HBM tensor.
    TODO(synk): move the kw/kh windowing (and this affine) fully in-kernel to
    drop the remaining ~3x unfolded-input HBM footprint.
    """
    B, D, R, C = raw.shape
    a = jnp.maximum(raw.astype(jnp.float32) * scale + shift, 0.0)
    a = a.astype(compute_dtype).reshape(B, D, H, W, C)
    ap = jnp.pad(a, ((0, 0), (1, 1), (1, 1), (1, 1), (0, 0)))
    xw = jnp.concatenate([ap[:, :, :, k:k + W, :] for k in range(3)], axis=-1)
    return xw.reshape(B, D + 2, (H + 2) * W, 3 * C)


def _conv3_weight(w_oikkk, cin_p, cout_p, dtype):
    """(O, I, 3, 3, 3) torch weight -> (27*cin_p, cout_p), rows ordered (kd,kh,kw,c)."""
    O, I = w_oikkk.shape[0], w_oikkk.shape[1]
    w = jnp.pad(w_oikkk, ((0, cout_p - O), (0, cin_p - I),
                          (0, 0), (0, 0), (0, 0)))
    return jnp.transpose(w, (2, 3, 4, 1, 0)).reshape(27 * cin_p, cout_p).astype(dtype)


# --------------------------------------------------------------------------- #
# ResidualBlock3d forward
# --------------------------------------------------------------------------- #
def residual_block_3d(x_ncdhw, params, compute_dtype=jnp.bfloat16,
                      out_dtype=jnp.float32):
    """Training-mode forward pass of ResidualBlock3d (see PyTorch spec)."""
    B, C_in, D, H, W = x_ncdhw.shape
    R = H * W
    C_out = params["w1"].shape[0]
    Cm = params["w2"].shape[0]
    Cp = _round_up(C_out, LANE)       # lane-dense channel widths
    Cmp = _round_up(Cm, LANE)

    # NCDHW -> channels-last [B, D, H*W, C] once at entry (and back at exit).
    x = jnp.transpose(x_ncdhw, (0, 2, 3, 4, 1)).reshape(B, D, R, C_in)
    x = x.astype(compute_dtype)

    def padc(v, n):                   # pad per-channel params with exact zeros
        return jnp.pad(v.astype(jnp.float32), (0, n - v.shape[0]))

    # ---- bottlenect: Conv3d(C_in, C_out, 1) (+bias) + BN + ReLU --------------
    # NOTE: weight relayout/cast should be hoisted out of the step fn when the
    # block is applied repeatedly with the same params.
    w1 = jnp.pad(params["w1"].reshape(C_out, C_in), ((0, Cp - C_out), (0, 0)))
    w1 = w1.T.astype(compute_dtype)                                   # (C_in, Cp)
    b1 = padc(params["b1"], Cp).reshape(1, Cp)
    raw1, st1 = _conv1x1_stats(x, w1, b1)                             # bf16 raw
    scale1, shift1 = _bn_scale_shift(st1, padc(params["bn1_gamma"], Cp),
                                     padc(params["bn1_beta"], Cp), R)

    # ---- block[0]: Conv3d(C_out, 4*C_out, 3, 1, 1, bias=False) + BN + ReLU ---
    # BN1-apply + ReLU are fused into conv2's input producer; `residual` never
    # hits HBM as its own tensor.
    xw2 = _post_bn_kw_unfold(raw1, scale1, shift1, H, W, compute_dtype)
    w2 = _conv3_weight(params["w2"], Cp, Cmp, compute_dtype)          # (27*Cp, Cmp)
    raw2, st2 = _conv3x3_stats(xw2, w2, H, W, compute_dtype)
    scale2, shift2 = _bn_scale_shift(st2, padc(params["bn2_gamma"], Cmp),
                                     padc(params["bn2_beta"], Cmp), R)

    # ---- block[1]: Conv3d(4*C_out, C_out, 3, 1, 1, bias=False) + BN ----------
    # BN2-apply + ReLU fused into conv3's input producer; the 4*C_out
    # activation `h` never hits HBM.
    xw3 = _post_bn_kw_unfold(raw2, scale2, shift2, H, W, compute_dtype)
    w3 = _conv3_weight(params["w3"], Cmp, Cp, compute_dtype)          # (27*Cmp, Cp)
    raw3, st3 = _conv3x3_stats(xw3, w3, H, W, compute_dtype)
    scale3, shift3 = _bn_scale_shift(st3, padc(params["bn3_gamma"], Cp),
                                     padc(params["bn3_beta"], Cp), R)

    # ---- out = ReLU(BN3(conv3) + ReLU(BN1(conv1)))  (single fused pass) ------
    p4 = jnp.stack([scale3, shift3, scale1, shift1], axis=0)          # (4, Cp)
    out = _bn_residual_relu(raw3, raw1, p4, out_dtype)                # (B,D,R,Cp)

    out = out.reshape(B, D, H, W, Cp)[..., :C_out]
    # TODO(synk): fold this transpose into the consumer / emit NDHWC directly.
    return jnp.transpose(out, (0, 4, 1, 2, 3))                        # -> NCDHW


# --------------------------------------------------------------------------- #
# Pure-JAX reference (mirrors the bf16 operand / f32 accumulation choices)
# --------------------------------------------------------------------------- #
def reference_forward(x_ncdhw, params, compute_dtype=jnp.bfloat16):
    def conv(x, w, pad):
        return jax.lax.conv_general_dilated(
            x.astype(compute_dtype), w.astype(compute_dtype),
            window_strides=(1, 1, 1), padding=[(pad, pad)] * 3,
            dimension_numbers=("NCDHW", "OIDHW", "NCDHW"),
            preferred_element_type=jnp.float32)

    def bn(y, gamma, beta):
        mean = jnp.mean(y, axis=(0, 2, 3, 4), keepdims=True)
        var = jnp.mean(jnp.square(y - mean), axis=(0, 2, 3, 4), keepdims=True)
        return ((y - mean) * jax.lax.rsqrt(var + EPS)
                * gamma.reshape(1, -1, 1, 1, 1) + beta.reshape(1, -1, 1, 1, 1))

    y = conv(x_ncdhw, params["w1"], 0) + params["b1"].reshape(1, -1, 1, 1, 1)
    residual = jnp.maximum(bn(y, params["bn1_gamma"], params["bn1_beta"]), 0.0)
    residual = residual.astype(compute_dtype)

    y = conv(residual, params["w2"], 1)
    h = jnp.maximum(bn(y, params["bn2_gamma"], params["bn2_beta"]), 0.0)
    h = h.astype(compute_dtype)

    y = conv(h, params["w3"], 1)
    out = bn(y, params["bn3_gamma"], params["bn3_beta"]) + residual.astype(jnp.float32)
    return jnp.maximum(out, 0.0)


# --------------------------------------------------------------------------- #
# Synthetic parameters
# --------------------------------------------------------------------------- #
def init_params(key, channel_in, channel_out):
    ks = jax.random.split(key, 4)
    Cm = 4 * channel_out

    def kaiming(k, shape, fan_in):
        return jax.random.normal(k, shape, jnp.float32) * jnp.sqrt(2.0 / fan_in)

    return dict(
        # bottlenect
        w1=kaiming(ks[0], (channel_out, channel_in, 1, 1, 1), channel_in),
        b1=jax.random.normal(ks[1], (channel_out,), jnp.float32) * 0.1,
        bn1_gamma=jnp.ones((channel_out,), jnp.float32),
        bn1_beta=jnp.zeros((channel_out,), jnp.float32),
        # block conv 1 (no bias)
        w2=kaiming(ks[2], (Cm, channel_out, 3, 3, 3), channel_out * 27),
        bn2_gamma=jnp.ones((Cm,), jnp.float32),
        bn2_beta=jnp.zeros((Cm,), jnp.float32),
        # block conv 2 (no bias)
        w3=kaiming(ks[3], (channel_out, Cm, 3, 3, 3), Cm * 27),
        bn3_gamma=jnp.ones((channel_out,), jnp.float32),
        bn3_beta=jnp.zeros((channel_out,), jnp.float32),
    )


if __name__ == "__main__":
    key = jax.random.PRNGKey(0)
    kx, kp = jax.random.split(key)

    B, C_in, C_out, D, H, W = 2, 4, 4, 8, 8, 8
    x = jax.random.normal(kx, (B, C_in, D, H, W), jnp.float32)    # NCDHW
    params = init_params(kp, C_in, C_out)

    out = jax.jit(residual_block_3d)(x, params)
    jax.block_until_ready(out)

    assert out.shape == (B, C_out, D, H, W), out.shape
    assert bool(jnp.all(out >= 0.0))          # final ReLU

    ref = jax.jit(reference_forward)(x, params)
    jax.block_until_ready(ref)
    err = float(jnp.max(jnp.abs(out - ref)))
    assert err < 1e-1, f"max abs error vs reference: {err}"

    print("KERNEL_OK")
</pallas_src>

<mosaic_0001>
module attributes {stable_mosaic.version = 11 : i64} {
  func.func @_conv1x1_stats_kernel(%arg0: i32, %arg1: i32, %arg2: memref<1x1x64x4xbf16, #tpu.memory_space<vmem>>, %arg3: memref<4x128xbf16, #tpu.memory_space<vmem>>, %arg4: memref<1x128xf32, #tpu.memory_space<vmem>>, %arg5: memref<1x1x64x128xbf16, #tpu.memory_space<vmem>>, %arg6: memref<1x1x2x128xf32, #tpu.memory_space<vmem>>) attributes {dimension_semantics = [#tpu.dimension_semantics<parallel>, #tpu.dimension_semantics<parallel>], iteration_bounds = array<i64: 2, 8>, scalar_prefetch = 0 : i64, scratch_operands = 0 : i64, tpu.core_type = #tpu.core_type<tc>, window_params = [{transform_indices = @transform_0, window_bounds = array<i64: 1, 1, 64, 4>}, {pipeline_mode = #tpu.pipeline_mode<synchronous>, transform_indices = @transform_1, window_bounds = array<i64: 4, 128>}, {pipeline_mode = #tpu.pipeline_mode<synchronous>, transform_indices = @transform_2, window_bounds = array<i64: 1, 128>}, {transform_indices = @transform_3, window_bounds = array<i64: 1, 1, 64, 128>}, {transform_indices = @transform_4, window_bounds = array<i64: 1, 1, 2, 128>}]} {
    %c0 = arith.constant 0 : index
    %c0_0 = arith.constant 0 : index
    %c0_1 = arith.constant 0 : index
    %c0_2 = arith.constant 0 : index
    %0 = vector.load %arg2[%c0, %c0_0, %c0_1, %c0_2] : memref<1x1x64x4xbf16, #tpu.memory_space<vmem>>, vector<1x1x64x4xbf16>
    %1 = vector.shape_cast %0 : vector<1x1x64x4xbf16> to vector<64x4xbf16>
    %c0_3 = arith.constant 0 : index
    %c0_4 = arith.constant 0 : index
    %2 = vector.load %arg3[%c0_3, %c0_4] : memref<4x128xbf16, #tpu.memory_space<vmem>>, vector<4x128xbf16>
    %cst = arith.constant dense<0.000000e+00> : vector<64x128xf32>
    %3 = tpu.matmul %1, %2, %cst {dimension_numbers = #tpu.dot_dimension_numbers<[1], [0], [0], [1], [0, 0, 1, 1], [], []>} : vector<64x4xbf16>, vector<4x128xbf16>, vector<64x128xf32> -> vector<64x128xf32>
    %c0_5 = arith.constant 0 : index
    %c0_6 = arith.constant 0 : index
    %4 = vector.load %arg4[%c0_5, %c0_6] : memref<1x128xf32, #tpu.memory_space<vmem>>, vector<1x128xf32>
    %5 = vector.broadcast %4 : vector<1x128xf32> to vector<64x128xf32>
    %6 = arith.addf %3, %5 : vector<64x128xf32>
    %7 = arith.truncf %6 : vector<64x128xf32> to vector<64x128xbf16>
    %c0_7 = arith.constant 0 : index
    %c0_8 = arith.constant 0 : index
    %c0_9 = arith.constant 0 : index
    %c0_10 = arith.constant 0 : index
    %8 = vector.load %arg5[%c0_7, %c0_8, %c0_9, %c0_10] : memref<1x1x64x128xbf16, #tpu.memory_space<vmem>>, vector<1x1x64x128xbf16>
    %9 = vector.shape_cast %8 : vector<1x1x64x128xbf16> to vector<64x128xbf16>
    %10 = vector.shape_cast %7 : vector<64x128xbf16> to vector<1x1x64x128xbf16>
    tpu.vector_store %arg5[%c0_7, %c0_8, %c0_9, %c0_10], %10 {strides = array<i32>} : memref<1x1x64x128xbf16, #tpu.memory_space<vmem>>, vector<1x1x64x128xbf16>,
    %cst_11 = arith.constant dense<0.000000e+00> : vector<128xf32>
    %11 = vector.multi_reduction <add>, %6, %cst_11 [0] : vector<64x128xf32> to vector<128xf32>
    %12 = vector.shape_cast %11 : vector<128xf32> to vector<1x128xf32>
    %cst_12 = arith.constant 1.562500e-02 : f32
    %13 = vector.broadcast %cst_12 : f32 to vector<1x128xf32>
    %14 = arith.mulf %12, %13 : vector<1x128xf32>
    %15 = vector.broadcast %14 : vector<1x128xf32> to vector<64x128xf32>
    %16 = arith.subf %6, %15 : vector<64x128xf32>
    %17 = arith.mulf %16, %16 : vector<64x128xf32>
    %cst_13 = arith.constant dense<0.000000e+00> : vector<128xf32>
    %18 = vector.multi_reduction <add>, %17, %cst_13 [0] : vector<64x128xf32> to vector<128xf32>
    %19 = vector.shape_cast %18 : vector<128xf32> to vector<1x128xf32>
    %20 = tpu.concatenate %12, %19 in 0 : vector<1x128xf32>, vector<1x128xf32> -> vector<2x128xf32>
    %c0_14 = arith.constant 0 : index
    %c0_15 = arith.constant 0 : index
    %c0_16 = arith.constant 0 : index
    %c0_17 = arith.constant 0 : index
    %21 = vector.load %arg6[%c0_14, %c0_15, %c0_16, %c0_17] : memref<1x1x2x128xf32, #tpu.memory_space<vmem>>, vector<1x1x2x128xf32>
    %22 = vector.shape_cast %21 : vector<1x1x2x128xf32> to vector<2x128xf32>
    %23 = vector.shape_cast %20 : vector<2x128xf32> to vector<1x1x2x128xf32>
    tpu.vector_store %arg6[%c0_14, %c0_15, %c0_16, %c0_17], %23 {strides = array<i32>} : memref<1x1x2x128xf32, #tpu.memory_space<vmem>>, vector<1x1x2x128xf32>,
    return
  }
  func.func @transform_0(%arg0: i32, %arg1: i32) -> (i32, i32, i32, i32) {
    %c0_i32 = arith.constant 0 : i32
    %c0_i32_0 = arith.constant 0 : i32
    %c0_i32_1 = arith.constant 0 : i32
    return %arg0, %arg1, %c0_i32, %c0_i32_0 : i32, i32, i32, i32
  }
  func.func @transform_1(%arg0: i32, %arg1: i32) -> (i32, i32) {
    %c0_i32 = arith.constant 0 : i32
    %c0_i32_0 = arith.constant 0 : i32
    %c0_i32_1 = arith.constant 0 : i32
    return %c0_i32, %c0_i32_0 : i32, i32
  }
  func.func @transform_2(%arg0: i32, %arg1: i32) -> (i32, i32) {
    %c0_i32 = arith.constant 0 : i32
    %c0_i32_0 = arith.constant 0 : i32
    %c0_i32_1 = arith.constant 0 : i32
    return %c0_i32, %c0_i32_0 : i32, i32
  }
  func.func @transform_3(%arg0: i32, %arg1: i32) -> (i32, i32, i32, i32) {
    %c0_i32 = arith.constant 0 : i32
    %c0_i32_0 = arith.constant 0 : i32
    %c0_i32_1 = arith.constant 0 : i32
    return %arg0, %arg1, %c0_i32, %c0_i32_0 : i32, i32, i32, i32
  }
  func.func @transform_4(%arg0: i32, %arg1: i32) -> (i32, i32, i32, i32) {
    %c0_i32 = arith.constant 0 : i32
    %c0_i32_0 = arith.constant 0 : i32
    %c0_i32_1 = arith.constant 0 : i32
    return %arg0, %arg1, %c0_i32, %c0_i32_0 : i32, i32, i32, i32
  }
}

module attributes {stable_mosaic.version = 11 : i64} {
  func.func @_conv3x3x3_stats_kernel(%arg0: i32, %arg1: i32, %arg2: i32, %arg3: memref<1x1x80x384xbf16, #tpu.memory_space<vmem>>, %arg4: memref<3456x128xbf16, #tpu.memory_space<vmem>>, %arg5: memref<1x1x64x128xbf16, #tpu.memory_space<vmem>>, %arg6: memref<1x1x2x128xf32, #tpu.memory_space<vmem>>, %arg7: memref<64x128xf32, #tpu.memory_space<vmem>>) attributes {dimension_semantics = [#tpu.dimension_semantics<parallel>, #tpu.dimension_semantics<parallel>, #tpu.dimension_semantics<arbitrary>], iteration_bounds = array<i64: 2, 8, 3>, scalar_prefetch = 0 : i64, scratch_operands = 1 : i64, tpu.core_type = #tpu.core_type<tc>, window_params = [{transform_indices = @transform_0, window_bounds = array<i64: 1, 1, 80, 384>}, {pipeline_mode = #tpu.pipeline_mode<synchronous>, transform_indices = @transform_1, window_bounds = array<i64: 3456, 128>}, {transform_indices = @transform_2, window_bounds = array<i64: 1, 1, 64, 128>}, {transform_indices = @transform_3, window_bounds = array<i64: 1, 1, 2, 128>}]} {
    %c0_i32 = arith.constant 0 : i32
    %0 = arith.cmpi eq, %arg2, %c0_i32 : i32
    %1 = arith.extui %0 : i1 to i32
    %c0_i32_0 = arith.constant 0 : i32
    %2 = arith.cmpi ne, %1, %c0_i32_0 : i32
    scf.if %2 {
      %cst_26 = arith.constant 0.000000e+00 : f32
      %38 = vector.broadcast %cst_26 : f32 to vector<64x128xf32>
      %c0_27 = arith.constant 0 : index
      %c0_28 = arith.constant 0 : index
      %39 = vector.load %arg7[%c0_27, %c0_28] : memref<64x128xf32, #tpu.memory_space<vmem>>, vector<64x128xf32>
      tpu.vector_store %arg7[%c0_27, %c0_28], %38 {strides = array<i32>} : memref<64x128xf32, #tpu.memory_space<vmem>>, vector<64x128xf32>,
    } else {
    }
    %c0 = arith.constant 0 : index
    %c0_1 = arith.constant 0 : index
    %c0_2 = arith.constant 0 : index
    %c0_3 = arith.constant 0 : index
    %3 = vector.load %arg3[%c0, %c0_1, %c0_2, %c0_3] : memref<1x1x80x384xbf16, #tpu.memory_space<vmem>>, vector<1x1x64x384xbf16>
    %4 = vector.shape_cast %3 : vector<1x1x64x384xbf16> to vector<64x384xbf16>
    %c3_i32 = arith.constant 3 : i32
    %5 = arith.muli %arg2, %c3_i32 : i32
    %c0_i32_4 = arith.constant 0 : i32
    %6 = arith.addi %5, %c0_i32_4 : i32
    %c384_i32 = arith.constant 384 : i32
    %7 = arith.muli %6, %c384_i32 : i32
    %8 = tpu.assume_multiple %7, 8 : i32
    %9 = arith.index_cast %8 : i32 to index
    %c0_5 = arith.constant 0 : index
    %10 = vector.load %arg4[%9, %c0_5] : memref<3456x128xbf16, #tpu.memory_space<vmem>>, vector<384x128xbf16>
    %cst = arith.constant dense<0.000000e+00> : vector<64x128xf32>
    %11 = tpu.matmul %4, %10, %cst {dimension_numbers = #tpu.dot_dimension_numbers<[1], [0], [0], [1], [0, 0, 1, 1], [], []>} : vector<64x384xbf16>, vector<384x128xbf16>, vector<64x128xf32> -> vector<64x128xf32>
    %c0_6 = arith.constant 0 : index
    %c0_7 = arith.constant 0 : index
    %c8 = arith.constant 8 : index
    %c0_8 = arith.constant 0 : index
    %12 = vector.load %arg3[%c0_6, %c0_7, %c8, %c0_8] : memref<1x1x80x384xbf16, #tpu.memory_space<vmem>>, vector<1x1x64x384xbf16>
    %13 = vector.shape_cast %12 : vector<1x1x64x384xbf16> to vector<64x384xbf16>
    %c3_i32_9 = arith.constant 3 : i32
    %14 = arith.muli %arg2, %c3_i32_9 : i32
    %c1_i32 = arith.constant 1 : i32
    %15 = arith.addi %14, %c1_i32 : i32
    %c384_i32_10 = arith.constant 384 : i32
    %16 = arith.muli %15, %c384_i32_10 : i32
    %17 = tpu.assume_multiple %16, 8 : i32
    %18 = arith.index_cast %17 : i32 to index
    %c0_11 = arith.constant 0 : index
    %19 = vector.load %arg4[%18, %c0_11] : memref<3456x128xbf16, #tpu.memory_space<vmem>>, vector<384x128xbf16>
    %cst_12 = arith.constant dense<0.000000e+00> : vector<64x128xf32>
    %20 = tpu.matmul %13, %19, %cst_12 {dimension_numbers = #tpu.dot_dimension_numbers<[1], [0], [0], [1], [0, 0, 1, 1], [], []>} : vector<64x384xbf16>, vector<384x128xbf16>, vector<64x128xf32> -> vector<64x128xf32>
    %21 = arith.addf %11, %20 : vector<64x128xf32>
    %c0_13 = arith.constant 0 : index
    %c0_14 = arith.constant 0 : index
    %c16 = arith.constant 16 : index
    %c0_15 = arith.constant 0 : index
    %22 = vector.load %arg3[%c0_13, %c0_14, %c16, %c0_15] : memref<1x1x80x384xbf16, #tpu.memory_space<vmem>>, vector<1x1x64x384xbf16>
    %23 = vector.shape_cast %22 : vector<1x1x64x384xbf16> to vector<64x384xbf16>
    %c3_i32_16 = arith.constant 3 : i32
    %24 = arith.muli %arg2, %c3_i32_16 : i32
    %c2_i32 = arith.constant 2 : i32
    %25 = arith.addi %24, %c2_i32 : i32
    %c384_i32_17 = arith.constant 384 : i32
    %26 = arith.muli %25, %c384_i32_17 : i32
    %27 = tpu.assume_multiple %26, 8 : i32
    %28 = arith.index_cast %27 : i32 to index
    %c0_18 = arith.constant 0 : index
    %29 = vector.load %arg4[%28, %c0_18] : memref<3456x128xbf16, #tpu.memory_space<vmem>>, vector<384x128xbf16>
    %cst_19 = arith.constant dense<0.000000e+00> : vector<64x128xf32>
    %30 = tpu.matmul %23, %29, %cst_19 {dimension_numbers = #tpu.dot_dimension_numbers<[1], [0], [0], [1], [0, 0, 1, 1], [], []>} : vector<64x384xbf16>, vector<384x128xbf16>, vector<64x128xf32> -> vector<64x128xf32>
    %31 = arith.addf %21, %30 : vector<64x128xf32>
    %c0_20 = arith.constant 0 : index
    %c0_21 = arith.constant 0 : index
    %32 = vector.load %arg7[%c0_20, %c0_21] : memref<64x128xf32, #tpu.memory_space<vmem>>, vector<64x128xf32>
    %33 = arith.addf %32, %31 : vector<64x128xf32>
    %c0_22 = arith.constant 0 : index
    %c0_23 = arith.constant 0 : index
    %34 = vector.load %arg7[%c0_22, %c0_23] : memref<64x128xf32, #tpu.memory_space<vmem>>, vector<64x128xf32>
    tpu.vector_store %arg7[%c0_22, %c0_23], %33 {strides = array<i32>} : memref<64x128xf32, #tpu.memory_space<vmem>>, vector<64x128xf32>,
    %c2_i32_24 = arith.constant 2 : i32
    %35 = arith.cmpi eq, %arg2, %c2_i32_24 : i32
    %36 = arith.extui %35 : i1 to i32
    %c0_i32_25 = arith.constant 0 : i32
    %37 = arith.cmpi ne, %36, %c0_i32_25 : i32
    scf.if %37 {
      %c0_26 = arith.constant 0 : index
      %c0_27 = arith.constant 0 : index
      %38 = vector.load %arg7[%c0_26, %c0_27] : memref<64x128xf32, #tpu.memory_space<vmem>>, vector<64x128xf32>
      %39 = arith.truncf %38 : vector<64x128xf32> to vector<64x128xbf16>
      %c0_28 = arith.constant 0 : index
      %c0_29 = arith.constant 0 : index
      %c0_30 = arith.constant 0 : index
      %c0_31 = arith.constant 0 : index
      %40 = vector.load %arg5[%c0_28, %c0_29, %c0_30, %c0_31] : memref<1x1x64x128xbf16, #tpu.memory_space<vmem>>, vector<1x1x64x128xbf16>
      %41 = vector.shape_cast %40 : vector<1x1x64x128xbf16> to vector<64x128xbf16>
      %42 = vector.shape_cast %39 : vector<64x128xbf16> to vector<1x1x64x128xbf16>
      tpu.vector_store %arg5[%c0_28, %c0_29, %c0_30, %c0_31], %42 {strides = array<i32>} : memref<1x1x64x128xbf16, #tpu.memory_space<vmem>>, vector<1x1x64x128xbf16>,
      %cst_32 = arith.constant dense<0.000000e+00> : vector<128xf32>
      %43 = vector.multi_reduction <add>, %38, %cst_32 [0] : vector<64x128xf32> to vector<128xf32>
      %44 = vector.shape_cast %43 : vector<128xf32> to vector<1x128xf32>
      %cst_33 = arith.constant 1.562500e-02 : f32
      %45 = vector.broadcast %cst_33 : f32 to vector<1x128xf32>
      %46 = arith.mulf %44, %45 : vector<1x128xf32>
      %47 = vector.broadcast %46 : vector<1x128xf32> to vector<64x128xf32>
      %48 = arith.subf %38, %47 : vector<64x128xf32>
      %49 = arith.mulf %48, %48 : vector<64x128xf32>
      %cst_34 = arith.constant dense<0.000000e+00> : vector<128xf32>
      %50 = vector.multi_reduction <add>, %49, %cst_34 [0] : vector<64x128xf32> to vector<128xf32>
      %51 = vector.shape_cast %50 : vector<128xf32> to vector<1x128xf32>
      %52 = tpu.concatenate %44, %51 in 0 : vector<1x128xf32>, vector<1x128xf32> -> vector<2x128xf32>
      %c0_35 = arith.constant 0 : index
      %c0_36 = arith.constant 0 : index
      %c0_37 = arith.constant 0 : index
      %c0_38 = arith.constant 0 : index
      %53 = vector.load %arg6[%c0_35, %c0_36, %c0_37, %c0_38] : memref<1x1x2x128xf32, #tpu.memory_space<vmem>>, vector<1x1x2x128xf32>
      %54 = vector.shape_cast %53 : vector<1x1x2x128xf32> to vector<2x128xf32>
      %55 = vector.shape_cast %52 : vector<2x128xf32> to vector<1x1x2x128xf32>
      tpu.vector_store %arg6[%c0_35, %c0_36, %c0_37, %c0_38], %55 {strides = array<i32>} : memref<1x1x2x128xf32, #tpu.memory_space<vmem>>, vector<1x1x2x128xf32>,
    } else {
    }
    return
  }
  func.func @transform_0(%arg0: i32, %arg1: i32, %arg2: i32) -> (i32, i32, i32, i32) {
    %0 = arith.addi %arg1, %arg2 : i32
    %c0_i32 = arith.constant 0 : i32
    %c0_i32_0 = arith.constant 0 : i32
    %c0_i32_1 = arith.constant 0 : i32
    return %arg0, %0, %c0_i32, %c0_i32_0 : i32, i32, i32, i32
  }
  func.func @transform_1(%arg0: i32, %arg1: i32, %arg2: i32) -> (i32, i32) {
    %c0_i32 = arith.constant 0 : i32
    %c0_i32_0 = arith.constant 0 : i32
    %c0_i32_1 = arith.constant 0 : i32
    return %c0_i32, %c0_i32_0 : i32, i32
  }
  func.func @transform_2(%arg0: i32, %arg1: i32, %arg2: i32) -> (i32, i32, i32, i32) {
    %c0_i32 = arith.constant 0 : i32
    %c0_i32_0 = arith.constant 0 : i32
    %c0_i32_1 = arith.constant 0 : i32
    return %arg0, %arg1, %c0_i32, %c0_i32_0 : i32, i32, i32, i32
  }
  func.func @transform_3(%arg0: i32, %arg1: i32, %arg2: i32) -> (i32, i32, i32, i32) {
    %c0_i32 = arith.constant 0 : i32
    %c0_i32_0 = arith.constant 0 : i32
    %c0_i32_1 = arith.constant 0 : i32
    return %arg0, %arg1, %c0_i32, %c0_i32_0 : i32, i32, i32, i32
  }
}

module attributes {stable_mosaic.version = 11 : i64} {
  func.func @_bn_residual_relu_kernel(%arg0: i32, %arg1: i32, %arg2: memref<1x1x64x128xbf16, #tpu.memory_space<vmem>>, %arg3: memref<1x1x64x128xbf16, #tpu.memory_space<vmem>>, %arg4: memref<4x128xf32, #tpu.memory_space<vmem>>, %arg5: memref<1x1x64x128xf32, #tpu.memory_space<vmem>>) attributes {dimension_semantics = [#tpu.dimension_semantics<parallel>, #tpu.dimension_semantics<parallel>], iteration_bounds = array<i64: 2, 8>, scalar_prefetch = 0 : i64, scratch_operands = 0 : i64, tpu.core_type = #tpu.core_type<tc>, window_params = [{transform_indices = @transform_0, window_bounds = array<i64: 1, 1, 64, 128>}, {transform_indices = @transform_1, window_bounds = array<i64: 1, 1, 64, 128>}, {pipeline_mode = #tpu.pipeline_mode<synchronous>, transform_indices = @transform_2, window_bounds = array<i64: 4, 128>}, {transform_indices = @transform_3, window_bounds = array<i64: 1, 1, 64, 128>}]} {
    %c0 = arith.constant 0 : index
    %c0_0 = arith.constant 0 : index
    %0 = vector.load %arg4[%c0, %c0_0] : memref<4x128xf32, #tpu.memory_space<vmem>>, vector<4x128xf32>
    %c0_1 = arith.constant 0 : index
    %c0_2 = arith.constant 0 : index
    %c0_3 = arith.constant 0 : index
    %c0_4 = arith.constant 0 : index
    %1 = vector.load %arg3[%c0_1, %c0_2, %c0_3, %c0_4] : memref<1x1x64x128xbf16, #tpu.memory_space<vmem>>, vector<1x1x64x128xbf16>
    %2 = vector.shape_cast %1 : vector<1x1x64x128xbf16> to vector<64x128xbf16>
    %3 = arith.extf %2 : vector<64x128xbf16> to vector<64x128xf32>
    %4 = vector.extract_strided_slice %0 {offsets = [0, 0], sizes = [1, 128], strides = [1, 1]} : vector<4x128xf32> to vector<1x128xf32>
    %5 = vector.broadcast %4 : vector<1x128xf32> to vector<64x128xf32>
    %6 = arith.mulf %3, %5 : vector<64x128xf32>
    %cst = arith.constant 0.000000e+00 : f32
    %7 = vector.broadcast %cst : f32 to vector<64x128xf32>
    %8 = arith.mulf %6, %7 : vector<64x128xf32>
    %c0_5 = arith.constant 0 : index
    %c0_6 = arith.constant 0 : index
    %c0_7 = arith.constant 0 : index
    %c0_8 = arith.constant 0 : index
    %9 = vector.load %arg3[%c0_5, %c0_6, %c0_7, %c0_8] : memref<1x1x64x128xbf16, #tpu.memory_space<vmem>>, vector<1x1x64x128xbf16>
    %10 = vector.shape_cast %9 : vector<1x1x64x128xbf16> to vector<64x128xbf16>
    %11 = arith.extf %10 : vector<64x128xbf16> to vector<64x128xf32>
    %12 = vector.extract_strided_slice %0 {offsets = [2, 0], sizes = [1, 128], strides = [1, 1]} : vector<4x128xf32> to vector<1x128xf32>
    %13 = vector.broadcast %12 : vector<1x128xf32> to vector<64x128xf32>
    %14 = arith.mulf %11, %13 : vector<64x128xf32>
    %15 = arith.addf %8, %14 : vector<64x128xf32>
    %16 = vector.extract_strided_slice %0 {offsets = [3, 0], sizes = [1, 128], strides = [1, 1]} : vector<4x128xf32> to vector<1x128xf32>
    %17 = vector.broadcast %16 : vector<1x128xf32> to vector<64x128xf32>
    %18 = arith.addf %15, %17 : vector<64x128xf32>
    %cst_9 = arith.constant 0.000000e+00 : f32
    %19 = vector.broadcast %cst_9 : f32 to vector<64x128xf32>
    %20 = arith.maximumf %18, %19 : vector<64x128xf32>
    %c0_10 = arith.constant 0 : index
    %c0_11 = arith.constant 0 : index
    %c0_12 = arith.constant 0 : index
    %c0_13 = arith.constant 0 : index
    %21 = vector.load %arg2[%c0_10, %c0_11, %c0_12, %c0_13] : memref<1x1x64x128xbf16, #tpu.memory_space<vmem>>, vector<1x1x64x128xbf16>
    %22 = vector.shape_cast %21 : vector<1x1x64x128xbf16> to vector<64x128xbf16>
    %23 = arith.extf %22 : vector<64x128xbf16> to vector<64x128xf32>
    %24 = vector.extract_strided_slice %0 {offsets = [0, 0], sizes = [1, 128], strides = [1, 1]} : vector<4x128xf32> to vector<1x128xf32>
    %25 = vector.broadcast %24 : vector<1x128xf32> to vector<64x128xf32>
    %26 = arith.mulf %23, %25 : vector<64x128xf32>
    %27 = vector.extract_strided_slice %0 {offsets = [1, 0], sizes = [1, 128], strides = [1, 1]} : vector<4x128xf32> to vector<1x128xf32>
    %28 = vector.broadcast %27 : vector<1x128xf32> to vector<64x128xf32>
    %29 = arith.addf %26, %28 : vector<64x128xf32>
    %30 = arith.addf %29, %20 : vector<64x128xf32>
    %cst_14 = arith.constant 0.000000e+00 : f32
    %31 = vector.broadcast %cst_14 : f32 to vector<64x128xf32>
    %32 = arith.maximumf %30, %31 : vector<64x128xf32>
    %c0_15 = arith.constant 0 : index
    %c0_16 = arith.constant 0 : index
    %c0_17 = arith.constant 0 : index
    %c0_18 = arith.constant 0 : index
    %33 = vector.load %arg5[%c0_15, %c0_16, %c0_17, %c0_18] : memref<1x1x64x128xf32, #tpu.memory_space<vmem>>, vector<1x1x64x128xf32>
    %34 = vector.shape_cast %33 : vector<1x1x64x128xf32> to vector<64x128xf32>
    %35 = vector.shape_cast %32 : vector<64x128xf32> to vector<1x1x64x128xf32>
    tpu.vector_store %arg5[%c0_15, %c0_16, %c0_17, %c0_18], %35 {strides = array<i32>} : memref<1x1x64x128xf32, #tpu.memory_space<vmem>>, vector<1x1x64x128xf32>,
    return
  }
  func.func @transform_0(%arg0: i32, %arg1: i32) -> (i32, i32, i32, i32) {
    %c0_i32 = arith.constant 0 : i32
    %c0_i32_0 = arith.constant 0 : i32
    %c0_i32_1 = arith.constant 0 : i32
    return %arg0, %arg1, %c0_i32, %c0_i32_0 : i32, i32, i32, i32
  }
  func.func @transform_1(%arg0: i32, %arg1: i32) -> (i32, i32, i32, i32) {
    %c0_i32 = arith.constant 0 : i32
    %c0_i32_0 = arith.constant 0 : i32
    %c0_i32_1 = arith.constant 0 : i32
    return %arg0, %arg1, %c0_i32, %c0_i32_0 : i32, i32, i32, i32
  }
  func.func @transform_2(%arg0: i32, %arg1: i32) -> (i32, i32) {
    %c0_i32 = arith.constant 0 : i32
    %c0_i32_0 = arith.constant 0 : i32
    %c0_i32_1 = arith.constant 0 : i32
    return %c0_i32, %c0_i32_0 : i32, i32
  }
  func.func @transform_3(%arg0: i32, %arg1: i32) -> (i32, i32, i32, i32) {
    %c0_i32 = arith.constant 0 : i32
    %c0_i32_0 = arith.constant 0 : i32
    %c0_i32_1 = arith.constant 0 : i32
    return %arg0, %arg1, %c0_i32, %c0_i32_0 : i32, i32, i32, i32
  }
}

</mosaic_0001>

<llo_original>
// kernel: residual_block_3d.4
$region0: #{residual_block_3d.4}
  #allocation0 [shape = 'u32[]', space=smem, size = 0x4, offset = 0x4, fixed_abs, tag = 'smem constant byte address 0x4 - core index']
  #allocation1 [shape = 'u32[72,128]{1,0:T(1,128)}', space=vmem, size = 0x9000, scoped, tag = 'internal scratch']
  %s0 = inlined_call_operand.vmem [shape: bf16[2,8,64,4], index: 0, kind: input, shape index: {}]
  %s1 = inlined_call_operand.vmem [shape: bf16[4,128], index: 1, kind: input, shape index: {}]
  %s2 = inlined_call_operand.vmem [shape: f32[1,128], index: 2, kind: input, shape index: {}]
  %s3 = inlined_call_operand.vmem [shape: bf16[2,8,64,128], index: 3, kind: output, shape index: {0}]
  %s4 = inlined_call_operand.vmem [shape: f32[2,8,2,128], index: 4, kind: output, shape index: {1}]
  %5 = xla_tuple %s3, %s4
  %s6 = sld [smem:[#allocation0]]
  $region53: #{residual_block_3d.4} parent=0
    _
  %s8 = ssub.s32 1, %s6
  %s9 = scalar_select 0, %s8, %s6
  loop: start=0, step=1, limit=18
  $region2: #{residual_block_3d.4} parent=0 // loop_pre_header
    _
  $region3: #{residual_block_3d.4} parent=0 // loop_header
    %s11 = sphi 0, %s15
    %p12 = scmp.ge.s32.totalorder %s11, 18
    %s18 = sphi 0, %s30
    %s19 = sphi 0, %s26
    %s20 = sphi 0, %s18
    %s21 = sphi 0, %s19
    %s22 = sphi 0, %s20
    %s23 = sphi 0, %s21
    %s35 = sphi 0, %s37
    %s38 = sphi 0, %s35
    %s39 = sphi 0, %s38
    %s55 = sphi 0, %s39
    %s59 = sphi 0, %s59
    %s61 = sphi 0, %s59
    %s62 = sphi 0, %s61
    %s76 = sphi 0, %s62
    %s80 = sphi 0, %s80
    %s82 = sphi 0, %s80
    %s83 = sphi 0, %s82
    %s97 = sphi 0, %s83
    %s105 = sphi 0, %s107
    %s108 = sphi 0, %s105
    %s109 = sphi 0, %s108
    %s125 = sphi 0, %s109
    %s133 = sphi 0, %s135
    %s136 = sphi 0, %s133
    %s137 = sphi 0, %s136
    %s153 = sphi 0, %s137
  $region4: #{residual_block_3d.4} parent=0 // loop_header_branch
    %14 = sbr.rel (%p12) target = $region8
  $region5: #{residual_block_3d.4} parent=0 // loop_body
    %s16 = ssub.s32 %s11, 1
    %s17 = ssub.s32 %s11, 2
    %s24 = sadd.s32 1, %s19
    %p25 = scmp.ge.s32.totalorder %s24, 8
    %s26 = scalar_select %p25, 0, %s24
    %s27 = sadd.s32 1, %s18
    %s28 = scalar_select %p25, %s27, %s18
    %p29 = scmp.ge.s32.totalorder %s28, 2
    %s30 = scalar_select %p29, 0, %s28
    %s31 = ssub.s32 %s18, %s30
    %s32 = ssub.s32 %s19, %s26
    %s33 = sor.u32 %s31, %s32
    %p34 = scmp.eq.s32.totalorder %s33, 0
    %s36 = sadd.s32 %s35, 1
    %s37 = scalar_select %p34, %s35, %s36
    %p40 = pneg %p34
    %p41 = scmp.eq.s32.totalorder %s11, 15
    %p42 = por %p40, %p41
    %p43 = scmp.ne.s32.totalorder %s35, %s38
    %p44 = scmp.eq.s32.totalorder %s11, 0
    %p45 = por %p43, %p44
    %p46 = scmp.ne.s32.totalorder %s35, %s38
    %p47 = scmp.eq.s32.totalorder %s16, 15
    %p48 = por %p46, %p47
    %p49 = scmp.ne.s32.totalorder %s38, %s39
    %p50 = scmp.eq.s32.totalorder %s16, 0
    %p51 = por %p49, %p50
    %p52 = scmp.ne.s32.totalorder %s38, %s39
    %p53 = scmp.eq.s32.totalorder %s17, 15
    %p54 = por %p52, %p53
    %p56 = scmp.ne.s32.totalorder %s39, %s55
    %p57 = scmp.eq.s32.totalorder %s17, 0
    %p58 = por %p56, %p57
    %s60 = sadd.s32 %s59, 1
    %p63 = scmp.eq.s32.totalorder %s11, 15
    %p64 = scmp.ne.s32.totalorder %s59, %s61
    %p65 = scmp.eq.s32.totalorder %s11, 0
    %p66 = por %p64, %p65
    %p67 = scmp.ne.s32.totalorder %s59, %s61
    %p68 = scmp.eq.s32.totalorder %s16, 15
    %p69 = por %p67, %p68
    %p70 = scmp.ne.s32.totalorder %s61, %s62
    %p71 = scmp.eq.s32.totalorder %s16, 0
    %p72 = por %p70, %p71
    %p73 = scmp.ne.s32.totalorder %s61, %s62
    %p74 = scmp.eq.s32.totalorder %s17, 15
    %p75 = por %p73, %p74
    %p77 = scmp.ne.s32.totalorder %s62, %s76
    %p78 = scmp.eq.s32.totalorder %s17, 0
    %p79 = por %p77, %p78
    %s81 = sadd.s32 %s80, 1
    %p84 = scmp.eq.s32.totalorder %s11, 15
    %p85 = scmp.ne.s32.totalorder %s80, %s82
    %p86 = scmp.eq.s32.totalorder %s11, 0
    %p87 = por %p85, %p86
    %p88 = scmp.ne.s32.totalorder %s80, %s82
    %p89 = scmp.eq.s32.totalorder %s16, 15
    %p90 = por %p88, %p89
    %p91 = scmp.ne.s32.totalorder %s82, %s83
    %p92 = scmp.eq.s32.totalorder %s16, 0
    %p93 = por %p91, %p92
    %p94 = scmp.ne.s32.totalorder %s82, %s83
    %p95 = scmp.eq.s32.totalorder %s17, 15
    %p96 = por %p94, %p95
    %p98 = scmp.ne.s32.totalorder %s83, %s97
    %p99 = scmp.eq.s32.totalorder %s17, 0
    %p100 = por %p98, %p99
    %s101 = ssub.s32 %s18, %s30
    %s102 = ssub.s32 %s19, %s26
    %s103 = sor.u32 %s101, %s102
    %p104 = scmp.eq.s32.totalorder %s103, 0
    %s106 = sadd.s32 %s105, 1
    %s107 = scalar_select %p104, %s105, %s106
    %p110 = pneg %p104
    %p111 = scmp.eq.s32.totalorder %s11, 15
    %p112 = por %p110, %p111
    %p113 = scmp.ne.s32.totalorder %s105, %s108
    %p114 = scmp.eq.s32.totalorder %s11, 0
    %p115 = por %p113, %p114
    %p116 = scmp.ne.s32.totalorder %s105, %s108
    %p117 = scmp.eq.s32.totalorder %s16, 15
    %p118 = por %p116, %p117
    %p119 = scmp.ne.s32.totalorder %s108, %s109
    %p120 = scmp.eq.s32.totalorder %s16, 0
    %p121 = por %p119, %p120
    %p122 = scmp.ne.s32.totalorder %s108, %s109
    %p123 = scmp.eq.s32.totalorder %s17, 15
    %p124 = por %p122, %p123
    %p126 = scmp.ne.s32.totalorder %s109, %s125
    %p127 = scmp.eq.s32.totalorder %s17, 0
    %p128 = por %p126, %p127
    %s129 = ssub.s32 %s18, %s30
    %s130 = ssub.s32 %s19, %s26
    %s131 = sor.u32 %s129, %s130
    %p132 = scmp.eq.s32.totalorder %s131, 0
    %s134 = sadd.s32 %s133, 1
    %s135 = scalar_select %p132, %s133, %s134
    %p138 = pneg %p132
    %p139 = scmp.eq.s32.totalorder %s11, 15
    %p140 = por %p138, %p139
    %p141 = scmp.ne.s32.totalorder %s133, %s136
    %p142 = scmp.eq.s32.totalorder %s11, 0
    %p143 = por %p141, %p142
    %p144 = scmp.ne.s32.totalorder %s133, %s136
    %p145 = scmp.eq.s32.totalorder %s16, 15
    %p146 = por %p144, %p145
    %p147 = scmp.ne.s32.totalorder %s136, %s137
    %p148 = scmp.eq.s32.totalorder %s16, 0
    %p149 = por %p147, %p148
    %p150 = scmp.ne.s32.totalorder %s136, %s137
    %p151 = scmp.eq.s32.totalorder %s17, 15
    %p152 = por %p150, %p151
    %p154 = scmp.ne.s32.totalorder %s137, %s153
    %p155 = scmp.eq.s32.totalorder %s17, 0
    %p156 = por %p154, %p155
    %p157 = scmp.le.s32.totalorder 1, %s11
    %p158 = scmp.lt.s32.totalorder %s11, 17
    %p159 = pnand %p157, %p158
    %p160 = pneg %p159
    // Predicated region
    $region9: #{residual_block_3d.4} parent=5 // pred_check
      _
    $region10: #{residual_block_3d.4} parent=5 // pred_check_branch
      %162 = sbr.rel (%p159) target = $region12
    $region11: #{residual_block_3d.4} parent=5 // pred_region
      %s163 = ssub.s32 %s11, 1
      // Predicated region
      $region13: #{residual_block_3d.4} parent=11 // pred_check
        %p164 = pneg %p72
      $region14: #{residual_block_3d.4} parent=11 // pred_check_branch
        %166 = sbr.rel (%p164) target = $region16
      $region15: #{residual_block_3d.4} parent=11 // pred_region
        _
      $region16: #{residual_block_3d.4} parent=11 // pred_fallthru
        _
      // Predicated region
      $region17: #{residual_block_3d.4} parent=11 // pred_check
        %p167 = pneg %p93
      $region18: #{residual_block_3d.4} parent=11 // pred_check_branch
        %169 = sbr.rel (%p167) target = $region20
      $region19: #{residual_block_3d.4} parent=11 // pred_region
        _
      $region20: #{residual_block_3d.4} parent=11 // pred_fallthru
        _
    $region12: #{residual_block_3d.4} parent=5 // pred_fallthru
      _
    %p170 = scmp.lt.s32.totalorder %s11, 16
    // Predicated region
    $region21: #{residual_block_3d.4} parent=5 // pred_check
      %p171 = pneg %p170
    $region22: #{residual_block_3d.4} parent=5 // pred_check_branch
      %173 = sbr.rel (%p171) target = $region24
    $region23: #{residual_block_3d.4} parent=5 // pred_region
      // Predicated region
      $region25: #{residual_block_3d.4} parent=23 // pred_check
        %p174 = pneg %p45
      $region26: #{residual_block_3d.4} parent=23 // pred_check_branch
        %176 = sbr.rel (%p174) target = $region28
      $region27: #{residual_block_3d.4} parent=23 // pred_region
        %p177 = scmp.lt.s32.totalorder %s18, 1
        %s178 = scalar_select %p177, %s18, 1
        %p179 = scmp.lt.s32.totalorder %s19, 7
        %s180 = scalar_select %p179, %s19, 7
        %s181 = smul.addr %s180, 8
        %s182 = smul.addr %s178, 64
        %s183 = sadd.s32 %s181, %s182
        %s184 = smul.addr %s183, 4
        %s185 = scalar_lea.vmem %s0, %s184
      $region28: #{residual_block_3d.4} parent=23 // pred_fallthru
        _
    $region24: #{residual_block_3d.4} parent=5 // pred_fallthru
      _
    %p186 = scmp.le.s32.totalorder 1, %s11
    %p187 = scmp.lt.s32.totalorder %s11, 17
    %p188 = pnand %p186, %p187
    %p189 = pneg %p188
    // Predicated region
    $region29: #{residual_block_3d.4} parent=5 // pred_check
      _
    $region30: #{residual_block_3d.4} parent=5 // pred_check_branch
      %191 = sbr.rel (%p188) target = $region32
    $region31: #{residual_block_3d.4} parent=5 // pred_region
      %s192 = ssub.s32 %s11, 1
      %p193 = scmp.lt.s32.totalorder %s20, 1
      %s194 = scalar_select %p193, %s20, 1
      %p195 = scmp.lt.s32.totalorder %s21, 7
      %s196 = scalar_select %p195, %s21, 7
      %s197 = smul.addr %s196, 8
      %s198 = smul.addr %s194, 64
      %s199 = sadd.s32 %s197, %s198
      %s200 = smul.addr %s199, 4
      %s201 = scalar_lea.vmem %s0, %s200
      %p202 = pneg %p51
      %p203 = pneg %p48
      %p204 = pneg %p72
      %p205 = pneg %p69
      %p206 = pneg %p93
      %p207 = pneg %p90
      %p208 = pneg %p121
      %p209 = pneg %p118
      %p210 = scmp.lt.s32.totalorder %s20, 1
      %s211 = scalar_select %p210, %s20, 1
      %p212 = scmp.lt.s32.totalorder %s21, 7
      %s213 = scalar_select %p212, %s21, 7
      %s214 = smul.addr %s213, 8
      %s215 = smul.addr %s211, 64
      %s216 = sadd.s32 %s214, %s215
      %s217 = smul.addr %s216, 4
      %s218 = scalar_lea.vmem %s3, %s217
      %p219 = pneg %p149
      %p220 = pneg %p146
      %p221 = scmp.lt.s32.totalorder %s20, 1
      %s222 = scalar_select %p221, %s20, 1
      %p223 = scmp.lt.s32.totalorder %s21, 7
      %s224 = scalar_select %p223, %s21, 7
      %s225 = smul.addr %s222, 8
      %s226 = sadd.s32 %s224, %s225
      %s227 = smul.addr %s226, 2
      %s228 = scalar_lea.vmem %s4, %s227
      %p229 = scmp.lt.s32.totalorder %s20, 1
      %s230 = scalar_select %p229, %s20, 1
      %p231 = scmp.lt.s32.totalorder %s21, 7
      %s232 = scalar_select %p231, %s21, 7
      %s233 = smul.addr %s232, 8
      %s234 = smul.addr %s230, 64
      %s235 = sadd.s32 %s233, %s234
      %s236 = smul.addr %s235, 4
      %s237 = scalar_lea.vmem %s0, %s236
      %p238 = scmp.lt.s32.totalorder %s20, 1
      %s239 = scalar_select %p238, %s20, 1
      %p240 = scmp.lt.s32.totalorder %s21, 7
      %s241 = scalar_select %p240, %s21, 7
      %s242 = smul.addr %s241, 8
      %s243 = smul.addr %s239, 64
      %s244 = sadd.s32 %s242, %s243
      %s245 = smul.addr %s244, 4
      %s246 = scalar_lea.vmem %s3, %s245
      %p247 = scmp.lt.s32.totalorder %s20, 1
      %s248 = scalar_select %p247, %s20, 1
      %p249 = scmp.lt.s32.totalorder %s21, 7
      %s250 = scalar_select %p249, %s21, 7
      %s251 = smul.addr %s248, 8
      %s252 = sadd.s32 %s250, %s251
      %s253 = smul.addr %s252, 2
      %s254 = scalar_lea.vmem %s4, %s253
      %v256 = vld [vmem:[%s237] sm:$0xf]
      %v257 = vld [vmem:[%s237 + $0x4] sm:$0xf]
      %v258 = vld [vmem:[%s237 + $0x8] sm:$0xf]
      %v259 = vld [vmem:[%s237 + $0xc] sm:$0xf]
      %v260 = vld [vmem:[%s237 + $0x10] sm:$0xf]
      %v261 = vld [vmem:[%s237 + $0x14] sm:$0xf]
      %v262 = vld [vmem:[%s237 + $0x18] sm:$0xf]
      %v263 = vld [vmem:[%s237 + $0x1c] sm:$0xf]
      %v264 = vld [vmem:[%s1] sm:$0x3]
      %v265 = vld [vmem:[%s2] sm:$0x1]
      %v267 = vperm.slane %v265, 0
      %v277 = vunpack.c.l.b16 %v256
      %v278 = vunpack.c.l.b16 %v257
      %v279 = vunpack.c.l.b16 %v258
      %v280 = vunpack.c.l.b16 %v259
      %v281 = vunpack.c.l.b16 %v260
      %v282 = vunpack.c.l.b16 %v261
      %v283 = vunpack.c.l.b16 %v262
      %v284 = vunpack.c.l.b16 %v263
      %v285 = vpack.c.b16 %v278, %v277
      %v286 = vpack.c.b16 %v280, %v279
      %v287 = vpack.c.b16 %v282, %v281
      %v288 = vpack.c.b16 %v284, %v283
      %vm289 = vcmask 31744
      %v291 = vsel %vm289, %v285, 0
      %v294 = vsel %vm289, %v286, 0
      %v297 = vsel %vm289, %v287, 0
      %v300 = vsel %vm289, %v288, 0
      %vm302 = vcmask 1041408
      %v304 = vsel %vm302, %v264, 0
      %306 = vmatpush.bf16.msra.mxu0 0
      %307 = vmatpush.bf16.msra.mxu0 0
      %308 = vmatpush.bf16.msra.mxu0 0
      %309 = vmatpush.bf16.msra.mxu0 0
      %310 = vmatpush.bf16.msra.mxu0 0
      %311 = vmatpush.bf16.msra.mxu0 0
      %312 = vmatpush.bf16.msra.mxu0 0
      %313 = vmatpush.bf16.msra.mxu0 %v304
      %314 = vmatmul.bf16.gmra.mxu0 %v291
      %v315 = vpop.f32.mrf.mxu0
      %v316 = vadd.f32 %v267, %v315
      %v317 = vpop.f32.mrf.mxu0
      %v318 = vadd.f32 %v267, %v317
      %319 = vmatmul.bf16.gmra.mxu0 %v294
      %v320 = vpop.f32.mrf.mxu0
      %v321 = vadd.f32 %v267, %v320
      %v322 = vpop.f32.mrf.mxu0
      %v323 = vadd.f32 %v267, %v322
      %324 = vmatmul.bf16.gmra.mxu0 %v297
      %v325 = vpop.f32.mrf.mxu0
      %v326 = vadd.f32 %v267, %v325
      %v327 = vpop.f32.mrf.mxu0
      %v328 = vadd.f32 %v267, %v327
      %329 = vmatmul.bf16.gmra.mxu0 %v300
      %v330 = vpop.f32.mrf.mxu0
      %v331 = vadd.f32 %v267, %v330
      %v332 = vpop.f32.mrf.mxu0
      %v333 = vadd.f32 %v267, %v332
      %334 = vdwg.mxu0
      %v335 = vpack.c.bf16 %v316, %v316
      %v336 = vpack.c.bf16 %v318, %v318
      %v337 = vpack.c.bf16 %v321, %v321
      %v338 = vpack.c.bf16 %v323, %v323
      %v339 = vpack.c.bf16 %v326, %v326
      %v340 = vpack.c.bf16 %v328, %v328
      %v341 = vpack.c.bf16 %v331, %v331
      %v342 = vpack.c.bf16 %v333, %v333
      %343 = vst [vmem:[%s246] sm:$0xf] %v335
      %344 = vst [vmem:[%s246 + $0x4] sm:$0xf] %v336
      %345 = vst [vmem:[%s246 + $0x8] sm:$0xf] %v337
      %346 = vst [vmem:[%s246 + $0xc] sm:$0xf] %v338
      %347 = vst [vmem:[%s246 + $0x10] sm:$0xf] %v339
      %348 = vst [vmem:[%s246 + $0x14] sm:$0xf] %v340
      %349 = vst [vmem:[%s246 + $0x18] sm:$0xf] %v341
      %350 = vst [vmem:[%s246 + $0x1c] sm:$0xf] %v342
      %v351 = vadd.f32 %v316, %v318
      %v352 = vadd.f32 %v351, %v321
      %v353 = vadd.f32 %v352, %v323
      %v354 = vadd.f32 %v353, %v326
      %v355 = vadd.f32 %v354, %v328
      %v356 = vadd.f32 %v355, %v331
      %v357 = vadd.f32 %v356, %v333
      %v358 = vrot.slane %v357, 4
      %v359 = vadd.f32 %v357, %v358
      %v360 = vrot.slane %v359, 2
      %v361 = vadd.f32 %v359, %v360
      %v362 = vrot.slane %v361, 1
      %v363 = vadd.f32 %v361, %v362
      %v364 = vmul.f32 %v363, 0.015625
      %v365 = vsub.f32 %v316, %v364
      %v366 = vsub.f32 %v318, %v364
      %v367 = vsub.f32 %v321, %v364
      %v368 = vsub.f32 %v323, %v364
      %v369 = vsub.f32 %v326, %v364
      %v370 = vsub.f32 %v328, %v364
      %v371 = vsub.f32 %v331, %v364
      %v372 = vsub.f32 %v333, %v364
      %v373 = vmul.f32 %v365, %v365
      %v374 = vmul.f32 %v366, %v366
      %v375 = vmul.f32 %v367, %v367
      %v376 = vmul.f32 %v368, %v368
      %v377 = vmul.f32 %v369, %v369
      %v378 = vmul.f32 %v370, %v370
      %v379 = vmul.f32 %v371, %v371
      %v380 = vmul.f32 %v372, %v372
      %v381 = vadd.f32 %v373, %v374
      %v382 = vadd.f32 %v381, %v375
      %v383 = vadd.f32 %v382, %v376
      %v384 = vadd.f32 %v383, %v377
      %v385 = vadd.f32 %v384, %v378
      %v386 = vadd.f32 %v385, %v379
      %v387 = vadd.f32 %v386, %v380
      %v388 = vrot.slane %v387, 4
      %v389 = vadd.f32 %v387, %v388
      %v390 = vrot.slane %v389, 2
      %v391 = vadd.f32 %v389, %v390
      %v392 = vrot.slane %v391, 1
      %v393 = vadd.f32 %v391, %v392
      %vm394 = vcmask 1040384
      %v395 = vsel %vm394, %v363, %v393
      %396 = vst [vmem:[%s254] sm:$0x3] %v395
      %p397 = scmp.lt.s32.totalorder %s20, 1
      %s398 = scalar_select %p397, %s20, 1
      %p399 = scmp.lt.s32.totalorder %s21, 7
      %s400 = scalar_select %p399, %s21, 7
      %s401 = smul.addr %s400, 8
      %s402 = smul.addr %s398, 64
      %s403 = sadd.s32 %s401, %s402
      %s404 = smul.addr %s403, 4
      %s405 = scalar_lea.vmem %s3, %s404
      %p406 = scmp.lt.s32.totalorder %s20, 1
      %s407 = scalar_select %p406, %s20, 1
      %p408 = scmp.lt.s32.totalorder %s21, 7
      %s409 = scalar_select %p408, %s21, 7
      %s410 = smul.addr %s407, 8
      %s411 = sadd.s32 %s409, %s410
      %s412 = smul.addr %s411, 2
      %s413 = scalar_lea.vmem %s4, %s412
      // Predicated region
      $region33: #{residual_block_3d.4} parent=31 // pred_check
        %p414 = pneg %p118
      $region34: #{residual_block_3d.4} parent=31 // pred_check_branch
        %416 = sbr.rel (%p414) target = $region36
      $region35: #{residual_block_3d.4} parent=31 // pred_region
        _
      $region36: #{residual_block_3d.4} parent=31 // pred_fallthru
        _
      // Predicated region
      $region37: #{residual_block_3d.4} parent=31 // pred_check
        %p417 = pneg %p146
      $region38: #{residual_block_3d.4} parent=31 // pred_check_branch
        %419 = sbr.rel (%p417) target = $region40
      $region39: #{residual_block_3d.4} parent=31 // pred_region
        _
      $region40: #{residual_block_3d.4} parent=31 // pred_fallthru
        _
    $region32: #{residual_block_3d.4} parent=5 // pred_fallthru
      _
    %p420 = scmp.le.s32.totalorder 2, %s11
    // Predicated region
    $region41: #{residual_block_3d.4} parent=5 // pred_check
      %p421 = pneg %p420
    $region42: #{residual_block_3d.4} parent=5 // pred_check_branch
      %423 = sbr.rel (%p421) target = $region44
    $region43: #{residual_block_3d.4} parent=5 // pred_region
      %s424 = ssub.s32 %s11, 2
      // Predicated region
      $region45: #{residual_block_3d.4} parent=43 // pred_check
        %p425 = pneg %p124
      $region46: #{residual_block_3d.4} parent=43 // pred_check_branch
        %427 = sbr.rel (%p425) target = $region48
      $region47: #{residual_block_3d.4} parent=43 // pred_region
        %p428 = scmp.lt.s32.totalorder %s22, 1
        %s429 = scalar_select %p428, %s22, 1
        %p430 = scmp.lt.s32.totalorder %s23, 7
        %s431 = scalar_select %p430, %s23, 7
        %s432 = smul.addr %s431, 8
        %s433 = smul.addr %s429, 64
        %s434 = sadd.s32 %s432, %s433
        %s435 = smul.addr %s434, 4
        %s436 = scalar_lea.vmem %s3, %s435
      $region48: #{residual_block_3d.4} parent=43 // pred_fallthru
        _
      // Predicated region
      $region49: #{residual_block_3d.4} parent=43 // pred_check
        %p437 = pneg %p152
      $region50: #{residual_block_3d.4} parent=43 // pred_check_branch
        %439 = sbr.rel (%p437) target = $region52
      $region51: #{residual_block_3d.4} parent=43 // pred_region
        %p440 = scmp.lt.s32.totalorder %s22, 1
        %s441 = scalar_select %p440, %s22, 1
        %p442 = scmp.lt.s32.totalorder %s23, 7
        %s443 = scalar_select %p442, %s23, 7
        %s444 = smul.addr %s441, 8
        %s445 = sadd.s32 %s443, %s444
        %s446 = smul.addr %s445, 2
        %s447 = scalar_lea.vmem %s4, %s446
      $region52: #{residual_block_3d.4} parent=43 // pred_fallthru
        _
    $region44: #{residual_block_3d.4} parent=5 // pred_fallthru
      _
  $region6: #{residual_block_3d.4} parent=0 // loop_footer
    %s15 = sadd.s32 1, %s11
  $region7: #{residual_block_3d.4} parent=0 // loop_footer_branch
    %10 = sbr.rel target = $region3
  $region8: #{residual_block_3d.4} parent=0 // loop_exit
    _

// kernel: residual_block_3d.7
$region0: #{residual_block_3d.7}
  #allocation0 [shape = 'u32[]', space=smem, size = 0x4, offset = 0x4, fixed_abs, tag = 'smem constant byte address 0x4 - core index']
  #allocation1 [shape = 'u32[72,128]{1,0:T(1,128)}', space=vmem, size = 0x9000, scoped, tag = 'internal scratch']
  %s0 = inlined_call_operand.vmem [shape: bf16[2,8,64,128], index: 0, kind: input, shape index: {}]
  %s1 = inlined_call_operand.vmem [shape: bf16[2,8,64,128], index: 1, kind: input, shape index: {}]
  %s2 = inlined_call_operand.vmem [shape: f32[4,128], index: 2, kind: input, shape index: {}]
  %s3 = inlined_call_operand.vmem [shape: f32[2,8,64,128], index: 3, kind: output, shape index: {}]
  %s4 = sld [smem:[#allocation0]]
  $region45: #{residual_block_3d.7} parent=0
    _
  %s6 = ssub.s32 1, %s4
  %s7 = scalar_select 0, %s6, %s4
  loop: start=0, step=1, limit=18
  $region2: #{residual_block_3d.7} parent=0 // loop_pre_header
    _
  $region3: #{residual_block_3d.7} parent=0 // loop_header
    %s9 = sphi 0, %s13
    %p10 = scmp.ge.s32.totalorder %s9, 18
    %s16 = sphi 0, %s28
    %s17 = sphi 0, %s24
    %s18 = sphi 0, %s16
    %s19 = sphi 0, %s17
    %s20 = sphi 0, %s18
    %s21 = sphi 0, %s19
    %s33 = sphi 0, %s35
    %s36 = sphi 0, %s33
    %s37 = sphi 0, %s36
    %s53 = sphi 0, %s37
    %s61 = sphi 0, %s63
    %s64 = sphi 0, %s61
    %s65 = sphi 0, %s64
    %s81 = sphi 0, %s65
    %s85 = sphi 0, %s85
    %s87 = sphi 0, %s85
    %s88 = sphi 0, %s87
    %s102 = sphi 0, %s88
    %s110 = sphi 0, %s112
    %s113 = sphi 0, %s110
    %s114 = sphi 0, %s113
    %s130 = sphi 0, %s114
  $region4: #{residual_block_3d.7} parent=0 // loop_header_branch
    %12 = sbr.rel (%p10) target = $region8
  $region5: #{residual_block_3d.7} parent=0 // loop_body
    %s14 = ssub.s32 %s9, 1
    %s15 = ssub.s32 %s9, 2
    %s22 = sadd.s32 1, %s17
    %p23 = scmp.ge.s32.totalorder %s22, 8
    %s24 = scalar_select %p23, 0, %s22
    %s25 = sadd.s32 1, %s16
    %s26 = scalar_select %p23, %s25, %s16
    %p27 = scmp.ge.s32.totalorder %s26, 2
    %s28 = scalar_select %p27, 0, %s26
    %s29 = ssub.s32 %s16, %s28
    %s30 = ssub.s32 %s17, %s24
    %s31 = sor.u32 %s29, %s30
    %p32 = scmp.eq.s32.totalorder %s31, 0
    %s34 = sadd.s32 %s33, 1
    %s35 = scalar_select %p32, %s33, %s34
    %p38 = pneg %p32
    %p39 = scmp.eq.s32.totalorder %s9, 15
    %p40 = por %p38, %p39
    %p41 = scmp.ne.s32.totalorder %s33, %s36
    %p42 = scmp.eq.s32.totalorder %s9, 0
    %p43 = por %p41, %p42
    %p44 = scmp.ne.s32.totalorder %s33, %s36
    %p45 = scmp.eq.s32.totalorder %s14, 15
    %p46 = por %p44, %p45
    %p47 = scmp.ne.s32.totalorder %s36, %s37
    %p48 = scmp.eq.s32.totalorder %s14, 0
    %p49 = por %p47, %p48
    %p50 = scmp.ne.s32.totalorder %s36, %s37
    %p51 = scmp.eq.s32.totalorder %s15, 15
    %p52 = por %p50, %p51
    %p54 = scmp.ne.s32.totalorder %s37, %s53
    %p55 = scmp.eq.s32.totalorder %s15, 0
    %p56 = por %p54, %p55
    %s57 = ssub.s32 %s16, %s28
    %s58 = ssub.s32 %s17, %s24
    %s59 = sor.u32 %s57, %s58
    %p60 = scmp.eq.s32.totalorder %s59, 0
    %s62 = sadd.s32 %s61, 1
    %s63 = scalar_select %p60, %s61, %s62
    %p66 = pneg %p60
    %p67 = scmp.eq.s32.totalorder %s9, 15
    %p68 = por %p66, %p67
    %p69 = scmp.ne.s32.totalorder %s61, %s64
    %p70 = scmp.eq.s32.totalorder %s9, 0
    %p71 = por %p69, %p70
    %p72 = scmp.ne.s32.totalorder %s61, %s64
    %p73 = scmp.eq.s32.totalorder %s14, 15
    %p74 = por %p72, %p73
    %p75 = scmp.ne.s32.totalorder %s64, %s65
    %p76 = scmp.eq.s32.totalorder %s14, 0
    %p77 = por %p75, %p76
    %p78 = scmp.ne.s32.totalorder %s64, %s65
    %p79 = scmp.eq.s32.totalorder %s15, 15
    %p80 = por %p78, %p79
    %p82 = scmp.ne.s32.totalorder %s65, %s81
    %p83 = scmp.eq.s32.totalorder %s15, 0
    %p84 = por %p82, %p83
    %s86 = sadd.s32 %s85, 1
    %p89 = scmp.eq.s32.totalorder %s9, 15
    %p90 = scmp.ne.s32.totalorder %s85, %s87
    %p91 = scmp.eq.s32.totalorder %s9, 0
    %p92 = por %p90, %p91
    %p93 = scmp.ne.s32.totalorder %s85, %s87
    %p94 = scmp.eq.s32.totalorder %s14, 15
    %p95 = por %p93, %p94
    %p96 = scmp.ne.s32.totalorder %s87, %s88
    %p97 = scmp.eq.s32.totalorder %s14, 0
    %p98 = por %p96, %p97
    %p99 = scmp.ne.s32.totalorder %s87, %s88
    %p100 = scmp.eq.s32.totalorder %s15, 15
    %p101 = por %p99, %p100
    %p103 = scmp.ne.s32.totalorder %s88, %s102
    %p104 = scmp.eq.s32.totalorder %s15, 0
    %p105 = por %p103, %p104
    %s106 = ssub.s32 %s16, %s28
    %s107 = ssub.s32 %s17, %s24
    %s108 = sor.u32 %s106, %s107
    %p109 = scmp.eq.s32.totalorder %s108, 0
    %s111 = sadd.s32 %s110, 1
    %s112 = scalar_select %p109, %s110, %s111
    %p115 = pneg %p109
    %p116 = scmp.eq.s32.totalorder %s9, 15
    %p117 = por %p115, %p116
    %p118 = scmp.ne.s32.totalorder %s110, %s113
    %p119 = scmp.eq.s32.totalorder %s9, 0
    %p120 = por %p118, %p119
    %p121 = scmp.ne.s32.totalorder %s110, %s113
    %p122 = scmp.eq.s32.totalorder %s14, 15
    %p123 = por %p121, %p122
    %p124 = scmp.ne.s32.totalorder %s113, %s114
    %p125 = scmp.eq.s32.totalorder %s14, 0
    %p126 = por %p124, %p125
    %p127 = scmp.ne.s32.totalorder %s113, %s114
    %p128 = scmp.eq.s32.totalorder %s15, 15
    %p129 = por %p127, %p128
    %p131 = scmp.ne.s32.totalorder %s114, %s130
    %p132 = scmp.eq.s32.totalorder %s15, 0
    %p133 = por %p131, %p132
    %p134 = scmp.le.s32.totalorder 1, %s9
    %p135 = scmp.lt.s32.totalorder %s9, 17
    %p136 = pnand %p134, %p135
    %p137 = pneg %p136
    // Predicated region
    $region9: #{residual_block_3d.7} parent=5 // pred_check
      _
    $region10: #{residual_block_3d.7} parent=5 // pred_check_branch
      %139 = sbr.rel (%p136) target = $region12
    $region11: #{residual_block_3d.7} parent=5 // pred_region
      %s140 = ssub.s32 %s9, 1
      // Predicated region
      $region13: #{residual_block_3d.7} parent=11 // pred_check
        %p141 = pneg %p98
      $region14: #{residual_block_3d.7} parent=11 // pred_check_branch
        %143 = sbr.rel (%p141) target = $region16
      $region15: #{residual_block_3d.7} parent=11 // pred_region
        _
      $region16: #{residual_block_3d.7} parent=11 // pred_fallthru
        _
    $region12: #{residual_block_3d.7} parent=5 // pred_fallthru
      _
    %p144 = scmp.lt.s32.totalorder %s9, 16
    // Predicated region
    $region17: #{residual_block_3d.7} parent=5 // pred_check
      %p145 = pneg %p144
    $region18: #{residual_block_3d.7} parent=5 // pred_check_branch
      %147 = sbr.rel (%p145) target = $region20
    $region19: #{residual_block_3d.7} parent=5 // pred_region
      // Predicated region
      $region21: #{residual_block_3d.7} parent=19 // pred_check
        %p148 = pneg %p43
      $region22: #{residual_block_3d.7} parent=19 // pred_check_branch
        %150 = sbr.rel (%p148) target = $region24
      $region23: #{residual_block_3d.7} parent=19 // pred_region
        %p151 = scmp.lt.s32.totalorder %s16, 1
        %s152 = scalar_select %p151, %s16, 1
        %p153 = scmp.lt.s32.totalorder %s17, 7
        %s154 = scalar_select %p153, %s17, 7
        %s155 = smul.addr %s154, 8
        %s156 = smul.addr %s152, 64
        %s157 = sadd.s32 %s155, %s156
        %s158 = smul.addr %s157, 4
        %s159 = scalar_lea.vmem %s0, %s158
      $region24: #{residual_block_3d.7} parent=19 // pred_fallthru
        _
      // Predicated region
      $region25: #{residual_block_3d.7} parent=19 // pred_check
        %p160 = pneg %p71
      $region26: #{residual_block_3d.7} parent=19 // pred_check_branch
        %162 = sbr.rel (%p160) target = $region28
      $region27: #{residual_block_3d.7} parent=19 // pred_region
        %p163 = scmp.lt.s32.totalorder %s16, 1
        %s164 = scalar_select %p163, %s16, 1
        %p165 = scmp.lt.s32.totalorder %s17, 7
        %s166 = scalar_select %p165, %s17, 7
        %s167 = smul.addr %s166, 8
        %s168 = smul.addr %s164, 64
        %s169 = sadd.s32 %s167, %s168
        %s170 = smul.addr %s169, 4
        %s171 = scalar_lea.vmem %s1, %s170
      $region28: #{residual_block_3d.7} parent=19 // pred_fallthru
        _
    $region20: #{residual_block_3d.7} parent=5 // pred_fallthru
      _
    %p172 = scmp.le.s32.totalorder 1, %s9
    %p173 = scmp.lt.s32.totalorder %s9, 17
    %p174 = pnand %p172, %p173
    %p175 = pneg %p174
    // Predicated region
    $region29: #{residual_block_3d.7} parent=5 // pred_check
      _
    $region30: #{residual_block_3d.7} parent=5 // pred_check_branch
      %177 = sbr.rel (%p174) target = $region32
    $region31: #{residual_block_3d.7} parent=5 // pred_region
      %s178 = ssub.s32 %s9, 1
      %p179 = scmp.lt.s32.totalorder %s18, 1
      %s180 = scalar_select %p179, %s18, 1
      %p181 = scmp.lt.s32.totalorder %s19, 7
      %s182 = scalar_select %p181, %s19, 7
      %s183 = smul.addr %s182, 8
      %s184 = smul.addr %s180, 64
      %s185 = sadd.s32 %s183, %s184
      %s186 = smul.addr %s185, 4
      %s187 = scalar_lea.vmem %s0, %s186
      %p188 = pneg %p49
      %p189 = pneg %p46
      %p190 = scmp.lt.s32.totalorder %s18, 1
      %s191 = scalar_select %p190, %s18, 1
      %p192 = scmp.lt.s32.totalorder %s19, 7
      %s193 = scalar_select %p192, %s19, 7
      %s194 = smul.addr %s193, 8
      %s195 = smul.addr %s191, 64
      %s196 = sadd.s32 %s194, %s195
      %s197 = smul.addr %s196, 4
      %s198 = scalar_lea.vmem %s1, %s197
      %p199 = pneg %p77
      %p200 = pneg %p74
      %p201 = pneg %p98
      %p202 = pneg %p95
      %p203 = pneg %p126
      %p204 = pneg %p123
      %p205 = scmp.lt.s32.totalorder %s18, 1
      %s206 = scalar_select %p205, %s18, 1
      %p207 = scmp.lt.s32.totalorder %s19, 7
      %s208 = scalar_select %p207, %s19, 7
      %s209 = smul.addr %s208, 8
      %s210 = smul.addr %s206, 64
      %s211 = sadd.s32 %s209, %s210
      %s212 = smul.addr %s211, 8
      %s213 = scalar_lea.vmem %s3, %s212
      %p214 = scmp.lt.s32.totalorder %s18, 1
      %s215 = scalar_select %p214, %s18, 1
      %p216 = scmp.lt.s32.totalorder %s19, 7
      %s217 = scalar_select %p216, %s19, 7
      %s218 = smul.addr %s217, 8
      %s219 = smul.addr %s215, 64
      %s220 = sadd.s32 %s218, %s219
      %s221 = smul.addr %s220, 4
      %s222 = scalar_lea.vmem %s0, %s221
      %p223 = scmp.lt.s32.totalorder %s18, 1
      %s224 = scalar_select %p223, %s18, 1
      %p225 = scmp.lt.s32.totalorder %s19, 7
      %s226 = scalar_select %p225, %s19, 7
      %s227 = smul.addr %s226, 8
      %s228 = smul.addr %s224, 64
      %s229 = sadd.s32 %s227, %s228
      %s230 = smul.addr %s229, 4
      %s231 = scalar_lea.vmem %s1, %s230
      %p232 = scmp.lt.s32.totalorder %s18, 1
      %s233 = scalar_select %p232, %s18, 1
      %p234 = scmp.lt.s32.totalorder %s19, 7
      %s235 = scalar_select %p234, %s19, 7
      %s236 = smul.addr %s235, 8
      %s237 = smul.addr %s233, 64
      %s238 = sadd.s32 %s236, %s237
      %s239 = smul.addr %s238, 8
      %s240 = scalar_lea.vmem %s3, %s239
      %v241 = vld [vmem:[%s2] sm:$0xf]
      %v242 = vld [vmem:[%s231] sm:$0xf]
      %v243 = vld [vmem:[%s231 + $0x4] sm:$0xf]
      %v244 = vld [vmem:[%s231 + $0x8] sm:$0xf]
      %v245 = vld [vmem:[%s231 + $0xc] sm:$0xf]
      %v246 = vld [vmem:[%s231 + $0x10] sm:$0xf]
      %v247 = vld [vmem:[%s231 + $0x14] sm:$0xf]
      %v248 = vld [vmem:[%s231 + $0x18] sm:$0xf]
      %v249 = vld [vmem:[%s231 + $0x1c] sm:$0xf]
      %v250 = vunpack.c.l.bf16 %v242
      %v251 = vunpack.c.l.bf16 %v243
      %v252 = vunpack.c.l.bf16 %v244
      %v253 = vunpack.c.l.bf16 %v245
      %v254 = vunpack.c.l.bf16 %v246
      %v255 = vunpack.c.l.bf16 %v247
      %v256 = vunpack.c.l.bf16 %v248
      %v257 = vunpack.c.l.bf16 %v249
      %v258 = vperm.slane %v241, 0
      %v259 = vmul.f32 %v250, %v258
      %v260 = vmul.f32 %v251, %v258
      %v261 = vmul.f32 %v252, %v258
      %v262 = vmul.f32 %v253, %v258
      %v263 = vmul.f32 %v254, %v258
      %v264 = vmul.f32 %v255, %v258
      %v265 = vmul.f32 %v256, %v258
      %v266 = vmul.f32 %v257, %v258
      %v267 = vmul.f32 %v259, 0.0
      %v268 = vmul.f32 %v260, 0.0
      %v269 = vmul.f32 %v261, 0.0
      %v270 = vmul.f32 %v262, 0.0
      %v271 = vmul.f32 %v263, 0.0
      %v272 = vmul.f32 %v264, 0.0
      %v273 = vmul.f32 %v265, 0.0
      %v274 = vmul.f32 %v266, 0.0
      %v275 = vperm.slane %v241, 2
      %v276 = vmul.f32 %v250, %v275
      %v277 = vmul.f32 %v251, %v275
      %v278 = vmul.f32 %v252, %v275
      %v279 = vmul.f32 %v253, %v275
      %v280 = vmul.f32 %v254, %v275
      %v281 = vmul.f32 %v255, %v275
      %v282 = vmul.f32 %v256, %v275
      %v283 = vmul.f32 %v257, %v275
      %v284 = vadd.f32 %v267, %v276
      %v285 = vadd.f32 %v268, %v277
      %v286 = vadd.f32 %v269, %v278
      %v287 = vadd.f32 %v270, %v279
      %v288 = vadd.f32 %v271, %v280
      %v289 = vadd.f32 %v272, %v281
      %v290 = vadd.f32 %v273, %v282
      %v291 = vadd.f32 %v274, %v283
      %v292 = vperm.slane %v241, 3
      %v293 = vadd.f32 %v284, %v292
      %v294 = vadd.f32 %v285, %v292
      %v295 = vadd.f32 %v286, %v292
      %v296 = vadd.f32 %v287, %v292
      %v297 = vadd.f32 %v288, %v292
      %v298 = vadd.f32 %v289, %v292
      %v299 = vadd.f32 %v290, %v292
      %v300 = vadd.f32 %v291, %v292
      %v301 = vmax.f32 %v293, 0.0
      %v302 = vmax.f32 %v294, 0.0
      %v303 = vmax.f32 %v295, 0.0
      %v304 = vmax.f32 %v296, 0.0
      %v305 = vmax.f32 %v297, 0.0
      %v306 = vmax.f32 %v298, 0.0
      %v307 = vmax.f32 %v299, 0.0
      %v308 = vmax.f32 %v300, 0.0
      %v309 = vld [vmem:[%s222] sm:$0xf]
      %v310 = vld [vmem:[%s222 + $0x4] sm:$0xf]
      %v311 = vld [vmem:[%s222 + $0x8] sm:$0xf]
      %v312 = vld [vmem:[%s222 + $0xc] sm:$0xf]
      %v313 = vld [vmem:[%s222 + $0x10] sm:$0xf]
      %v314 = vld [vmem:[%s222 + $0x14] sm:$0xf]
      %v315 = vld [vmem:[%s222 + $0x18] sm:$0xf]
      %v316 = vld [vmem:[%s222 + $0x1c] sm:$0xf]
      %v317 = vunpack.c.l.bf16 %v309
      %v318 = vunpack.c.l.bf16 %v310
      %v319 = vunpack.c.l.bf16 %v311
      %v320 = vunpack.c.l.bf16 %v312
      %v321 = vunpack.c.l.bf16 %v313
      %v322 = vunpack.c.l.bf16 %v314
      %v323 = vunpack.c.l.bf16 %v315
      %v324 = vunpack.c.l.bf16 %v316
      %v325 = vmul.f32 %v317, %v258
      %v326 = vmul.f32 %v318, %v258
      %v327 = vmul.f32 %v319, %v258
      %v328 = vmul.f32 %v320, %v258
      %v329 = vmul.f32 %v321, %v258
      %v330 = vmul.f32 %v322, %v258
      %v331 = vmul.f32 %v323, %v258
      %v332 = vmul.f32 %v324, %v258
      %v333 = vperm.slane %v241, 1
      %v334 = vadd.f32 %v325, %v333
      %v335 = vadd.f32 %v326, %v333
      %v336 = vadd.f32 %v327, %v333
      %v337 = vadd.f32 %v328, %v333
      %v338 = vadd.f32 %v329, %v333
      %v339 = vadd.f32 %v330, %v333
      %v340 = vadd.f32 %v331, %v333
      %v341 = vadd.f32 %v332, %v333
      %v342 = vadd.f32 %v334, %v301
      %v343 = vadd.f32 %v335, %v302
      %v344 = vadd.f32 %v336, %v303
      %v345 = vadd.f32 %v337, %v304
      %v346 = vadd.f32 %v338, %v305
      %v347 = vadd.f32 %v339, %v306
      %v348 = vadd.f32 %v340, %v307
      %v349 = vadd.f32 %v341, %v308
      %v350 = vmax.f32 %v342, 0.0
      %v351 = vmax.f32 %v343, 0.0
      %v352 = vmax.f32 %v344, 0.0
      %v353 = vmax.f32 %v345, 0.0
      %v354 = vmax.f32 %v346, 0.0
      %v355 = vmax.f32 %v347, 0.0
      %v356 = vmax.f32 %v348, 0.0
      %v357 = vmax.f32 %v349, 0.0
      %358 = vst [vmem:[%s240] sm:$0xff] %v350
      %359 = vst [vmem:[%s240 + $0x8] sm:$0xff] %v351
      %360 = vst [vmem:[%s240 + $0x10] sm:$0xff] %v352
      %361 = vst [vmem:[%s240 + $0x18] sm:$0xff] %v353
      %362 = vst [vmem:[%s240 + $0x20] sm:$0xff] %v354
      %363 = vst [vmem:[%s240 + $0x28] sm:$0xff] %v355
      %364 = vst [vmem:[%s240 + $0x30] sm:$0xff] %v356
      %365 = vst [vmem:[%s240 + $0x38] sm:$0xff] %v357
      %p366 = scmp.lt.s32.totalorder %s18, 1
      %s367 = scalar_select %p366, %s18, 1
      %p368 = scmp.lt.s32.totalorder %s19, 7
      %s369 = scalar_select %p368, %s19, 7
      %s370 = smul.addr %s369, 8
      %s371 = smul.addr %s367, 64
      %s372 = sadd.s32 %s370, %s371
      %s373 = smul.addr %s372, 8
      %s374 = scalar_lea.vmem %s3, %s373
      // Predicated region
      $region33: #{residual_block_3d.7} parent=31 // pred_check
        %p375 = pneg %p123
      $region34: #{residual_block_3d.7} parent=31 // pred_check_branch
        %377 = sbr.rel (%p375) target = $region36
      $region35: #{residual_block_3d.7} parent=31 // pred_region
        _
      $region36: #{residual_block_3d.7} parent=31 // pred_fallthru
        _
    $region32: #{residual_block_3d.7} parent=5 // pred_fallthru
      _
    %p378 = scmp.le.s32.totalorder 2, %s9
    // Predicated region
    $region37: #{residual_block_3d.7} parent=5 // pred_check
      %p379 = pneg %p378
    $region38: #{residual_block_3d.7} parent=5 // pred_check_branch
      %381 = sbr.rel (%p379) target = $region40
    $region39: #{residual_block_3d.7} parent=5 // pred_region
      %s382 = ssub.s32 %s9, 2
      // Predicated region
      $region41: #{residual_block_3d.7} parent=39 // pred_check
        %p383 = pneg %p129
      $region42: #{residual_block_3d.7} parent=39 // pred_check_branch
        %385 = sbr.rel (%p383) target = $region44
      $region43: #{residual_block_3d.7} parent=39 // pred_region
        %p386 = scmp.lt.s32.totalorder %s20, 1
        %s387 = scalar_select %p386, %s20, 1
        %p388 = scmp.lt.s32.totalorder %s21, 7
        %s389 = scalar_select %p388, %s21, 7
        %s390 = smul.addr %s389, 8
        %s391 = smul.addr %s387, 64
        %s392 = sadd.s32 %s390, %s391
        %s393 = smul.addr %s392, 8
        %s394 = scalar_lea.vmem %s3, %s393
      $region44: #{residual_block_3d.7} parent=39 // pred_fallthru
        _
    $region40: #{residual_block_3d.7} parent=5 // pred_fallthru
      _
  $region6: #{residual_block_3d.7} parent=0 // loop_footer
    %s13 = sadd.s32 1, %s9
  $region7: #{residual_block_3d.7} parent=0 // loop_footer_branch
    %8 = sbr.rel target = $region3
  $region8: #{residual_block_3d.7} parent=0 // loop_exit
    _

// kernel: residual_block_3d.5
$region0: #{residual_block_3d.5}
  #allocation0 [shape = 'u32[]', space=smem, size = 0x4, offset = 0x4, fixed_abs, tag = 'smem constant byte address 0x4 - core index']
  #allocation1 [shape = 'u32[72,128]{1,0:T(1,128)}', space=vmem, size = 0x9000, scoped, tag = 'internal scratch']
  #allocation2 [shape = 'f32[64,128]{1,0:T(8,128)}', space=vmem, size = 0x8000, scoped, tag = 'scratch operand']
  %s0 = inlined_call_operand.vmem [shape: bf16[2,10,80,384], index: 0, kind: input, shape index: {}]
  %s1 = inlined_call_operand.vmem [shape: bf16[3456,128], index: 1, kind: input, shape index: {}]
  %s2 = inlined_call_operand.vmem [shape: bf16[2,8,64,128], index: 2, kind: output, shape index: {0}]
  %s3 = inlined_call_operand.vmem [shape: f32[2,8,2,128], index: 3, kind: output, shape index: {1}]
  %4 = xla_tuple %s2, %s3
  %s5 = sld [smem:[#allocation0]]
  $region57: #{residual_block_3d.5} parent=0
    _
  %s7 = ssub.s32 1, %s5
  %s8 = scalar_select 0, %s7, %s5
  loop: start=0, step=1, limit=50
  $region2: #{residual_block_3d.5} parent=0 // loop_pre_header
    _
  $region3: #{residual_block_3d.5} parent=0 // loop_header
    %s10 = sphi 0, %s14
    %p11 = scmp.ge.s32.totalorder %s10, 50
    %s17 = sphi 0, %s36
    %s18 = sphi 0, %s32
    %s19 = sphi 0, %s28
    %s20 = sphi 0, %s17
    %s21 = sphi 0, %s18
    %s22 = sphi 0, %s19
    %s23 = sphi 0, %s20
    %s24 = sphi 0, %s21
    %s25 = sphi 0, %s22
    %s43 = sphi 0, %s45
    %s46 = sphi 0, %s43
    %s47 = sphi 0, %s46
    %s63 = sphi 0, %s47
    %s67 = sphi 0, %s67
    %s69 = sphi 0, %s67
    %s70 = sphi 0, %s69
    %s84 = sphi 0, %s70
    %s92 = sphi 0, %s94
    %s95 = sphi 0, %s92
    %s96 = sphi 0, %s95
    %s112 = sphi 0, %s96
    %s120 = sphi 0, %s122
    %s123 = sphi 0, %s120
    %s124 = sphi 0, %s123
    %s140 = sphi 0, %s124
  $region4: #{residual_block_3d.5} parent=0 // loop_header_branch
    %13 = sbr.rel (%p11) target = $region8
  $region5: #{residual_block_3d.5} parent=0 // loop_body
    %s15 = ssub.s32 %s10, 1
    %s16 = ssub.s32 %s10, 2
    %s26 = sadd.s32 1, %s19
    %p27 = scmp.ge.s32.totalorder %s26, 3
    %s28 = scalar_select %p27, 0, %s26
    %s29 = sadd.s32 1, %s18
    %s30 = scalar_select %p27, %s29, %s18
    %p31 = scmp.ge.s32.totalorder %s30, 8
    %s32 = scalar_select %p31, 0, %s30
    %s33 = sadd.s32 1, %s17
    %s34 = scalar_select %p31, %s33, %s17
    %p35 = scmp.ge.s32.totalorder %s34, 2
    %s36 = scalar_select %p35, 0, %s34
    %s37 = sadd.s32 %s18, %s19
    %s38 = sadd.s32 %s32, %s28
    %s39 = ssub.s32 %s17, %s36
    %s40 = ssub.s32 %s37, %s38
    %s41 = sor.u32 %s39, %s40
    %p42 = scmp.eq.s32.totalorder %s41, 0
    %s44 = sadd.s32 %s43, 1
    %s45 = scalar_select %p42, %s43, %s44
    %p48 = pneg %p42
    %p49 = scmp.eq.s32.totalorder %s10, 47
    %p50 = por %p48, %p49
    %p51 = scmp.ne.s32.totalorder %s43, %s46
    %p52 = scmp.eq.s32.totalorder %s10, 0
    %p53 = por %p51, %p52
    %p54 = scmp.ne.s32.totalorder %s43, %s46
    %p55 = scmp.eq.s32.totalorder %s15, 47
    %p56 = por %p54, %p55
    %p57 = scmp.ne.s32.totalorder %s46, %s47
    %p58 = scmp.eq.s32.totalorder %s15, 0
    %p59 = por %p57, %p58
    %p60 = scmp.ne.s32.totalorder %s46, %s47
    %p61 = scmp.eq.s32.totalorder %s16, 47
    %p62 = por %p60, %p61
    %p64 = scmp.ne.s32.totalorder %s47, %s63
    %p65 = scmp.eq.s32.totalorder %s16, 0
    %p66 = por %p64, %p65
    %s68 = sadd.s32 %s67, 1
    %p71 = scmp.eq.s32.totalorder %s10, 47
    %p72 = scmp.ne.s32.totalorder %s67, %s69
    %p73 = scmp.eq.s32.totalorder %s10, 0
    %p74 = por %p72, %p73
    %p75 = scmp.ne.s32.totalorder %s67, %s69
    %p76 = scmp.eq.s32.totalorder %s15, 47
    %p77 = por %p75, %p76
    %p78 = scmp.ne.s32.totalorder %s69, %s70
    %p79 = scmp.eq.s32.totalorder %s15, 0
    %p80 = por %p78, %p79
    %p81 = scmp.ne.s32.totalorder %s69, %s70
    %p82 = scmp.eq.s32.totalorder %s16, 47
    %p83 = por %p81, %p82
    %p85 = scmp.ne.s32.totalorder %s70, %s84
    %p86 = scmp.eq.s32.totalorder %s16, 0
    %p87 = por %p85, %p86
    %s88 = ssub.s32 %s17, %s36
    %s89 = ssub.s32 %s18, %s32
    %s90 = sor.u32 %s88, %s89
    %p91 = scmp.eq.s32.totalorder %s90, 0
    %s93 = sadd.s32 %s92, 1
    %s94 = scalar_select %p91, %s92, %s93
    %p97 = pneg %p91
    %p98 = scmp.eq.s32.totalorder %s10, 47
    %p99 = por %p97, %p98
    %p100 = scmp.ne.s32.totalorder %s92, %s95
    %p101 = scmp.eq.s32.totalorder %s10, 0
    %p102 = por %p100, %p101
    %p103 = scmp.ne.s32.totalorder %s92, %s95
    %p104 = scmp.eq.s32.totalorder %s15, 47
    %p105 = por %p103, %p104
    %p106 = scmp.ne.s32.totalorder %s95, %s96
    %p107 = scmp.eq.s32.totalorder %s15, 0
    %p108 = por %p106, %p107
    %p109 = scmp.ne.s32.totalorder %s95, %s96
    %p110 = scmp.eq.s32.totalorder %s16, 47
    %p111 = por %p109, %p110
    %p113 = scmp.ne.s32.totalorder %s96, %s112
    %p114 = scmp.eq.s32.totalorder %s16, 0
    %p115 = por %p113, %p114
    %s116 = ssub.s32 %s17, %s36
    %s117 = ssub.s32 %s18, %s32
    %s118 = sor.u32 %s116, %s117
    %p119 = scmp.eq.s32.totalorder %s118, 0
    %s121 = sadd.s32 %s120, 1
    %s122 = scalar_select %p119, %s120, %s121
    %p125 = pneg %p119
    %p126 = scmp.eq.s32.totalorder %s10, 47
    %p127 = por %p125, %p126
    %p128 = scmp.ne.s32.totalorder %s120, %s123
    %p129 = scmp.eq.s32.totalorder %s10, 0
    %p130 = por %p128, %p129
    %p131 = scmp.ne.s32.totalorder %s120, %s123
    %p132 = scmp.eq.s32.totalorder %s15, 47
    %p133 = por %p131, %p132
    %p134 = scmp.ne.s32.totalorder %s123, %s124
    %p135 = scmp.eq.s32.totalorder %s15, 0
    %p136 = por %p134, %p135
    %p137 = scmp.ne.s32.totalorder %s123, %s124
    %p138 = scmp.eq.s32.totalorder %s16, 47
    %p139 = por %p137, %p138
    %p141 = scmp.ne.s32.totalorder %s124, %s140
    %p142 = scmp.eq.s32.totalorder %s16, 0
    %p143 = por %p141, %p142
    %p144 = scmp.le.s32.totalorder 1, %s10
    %p145 = scmp.lt.s32.totalorder %s10, 49
    %p146 = pnand %p144, %p145
    %p147 = pneg %p146
    // Predicated region
    $region9: #{residual_block_3d.5} parent=5 // pred_check
      _
    $region10: #{residual_block_3d.5} parent=5 // pred_check_branch
      %149 = sbr.rel (%p146) target = $region12
    $region11: #{residual_block_3d.5} parent=5 // pred_region
      %s150 = ssub.s32 %s10, 1
      // Predicated region
      $region13: #{residual_block_3d.5} parent=11 // pred_check
        %p151 = pneg %p80
      $region14: #{residual_block_3d.5} parent=11 // pred_check_branch
        %153 = sbr.rel (%p151) target = $region16
      $region15: #{residual_block_3d.5} parent=11 // pred_region
        _
      $region16: #{residual_block_3d.5} parent=11 // pred_fallthru
        _
    $region12: #{residual_block_3d.5} parent=5 // pred_fallthru
      _
    %p154 = scmp.lt.s32.totalorder %s10, 48
    // Predicated region
    $region17: #{residual_block_3d.5} parent=5 // pred_check
      %p155 = pneg %p154
    $region18: #{residual_block_3d.5} parent=5 // pred_check_branch
      %157 = sbr.rel (%p155) target = $region20
    $region19: #{residual_block_3d.5} parent=5 // pred_region
      // Predicated region
      $region21: #{residual_block_3d.5} parent=19 // pred_check
        %p158 = pneg %p53
      $region22: #{residual_block_3d.5} parent=19 // pred_check_branch
        %160 = sbr.rel (%p158) target = $region24
      $region23: #{residual_block_3d.5} parent=19 // pred_region
        %s161 = sadd.s32 %s18, %s19
        %p162 = scmp.lt.s32.totalorder %s17, 1
        %s163 = scalar_select %p162, %s17, 1
        %p164 = scmp.lt.s32.totalorder %s161, 9
        %s165 = scalar_select %p164, %s161, 9
        %s166 = smul.addr %s165, 30
        %s167 = smul.addr %s163, 300
        %s168 = sadd.s32 %s166, %s167
        %s169 = smul.addr %s168, 4
        %s170 = scalar_lea.vmem %s0, %s169
        %s171 = sadd.s32 %s18, %s19
      $region24: #{residual_block_3d.5} parent=19 // pred_fallthru
        _
    $region20: #{residual_block_3d.5} parent=5 // pred_fallthru
      _
    %p172 = scmp.le.s32.totalorder 1, %s10
    %p173 = scmp.lt.s32.totalorder %s10, 49
    %p174 = pnand %p172, %p173
    %p175 = pneg %p174
    // Predicated region
    $region25: #{residual_block_3d.5} parent=5 // pred_check
      _
    $region26: #{residual_block_3d.5} parent=5 // pred_check_branch
      %177 = sbr.rel (%p174) target = $region28
    $region27: #{residual_block_3d.5} parent=5 // pred_region
      %s178 = ssub.s32 %s10, 1
      %s179 = sadd.s32 %s21, %s22
      %p180 = scmp.lt.s32.totalorder %s20, 1
      %s181 = scalar_select %p180, %s20, 1
      %p182 = scmp.lt.s32.totalorder %s179, 9
      %s183 = scalar_select %p182, %s179, 9
      %s184 = smul.addr %s183, 30
      %s185 = smul.addr %s181, 300
      %s186 = sadd.s32 %s184, %s185
      %s187 = smul.addr %s186, 4
      %s188 = scalar_lea.vmem %s0, %s187
      %p189 = pneg %p59
      %p190 = pneg %p56
      %p191 = pneg %p80
      %p192 = pneg %p77
      %p193 = pneg %p108
      %p194 = pneg %p105
      %p195 = scmp.lt.s32.totalorder %s20, 1
      %s196 = scalar_select %p195, %s20, 1
      %p197 = scmp.lt.s32.totalorder %s21, 7
      %s198 = scalar_select %p197, %s21, 7
      %s199 = smul.addr %s198, 8
      %s200 = smul.addr %s196, 64
      %s201 = sadd.s32 %s199, %s200
      %s202 = smul.addr %s201, 4
      %s203 = scalar_lea.vmem %s2, %s202
      %p204 = pneg %p136
      %p205 = pneg %p133
      %p206 = scmp.lt.s32.totalorder %s20, 1
      %s207 = scalar_select %p206, %s20, 1
      %p208 = scmp.lt.s32.totalorder %s21, 7
      %s209 = scalar_select %p208, %s21, 7
      %s210 = smul.addr %s207, 8
      %s211 = sadd.s32 %s209, %s210
      %s212 = smul.addr %s211, 2
      %s213 = scalar_lea.vmem %s3, %s212
      %s214 = sadd.s32 %s21, %s22
      %p215 = scmp.lt.s32.totalorder %s20, 1
      %s216 = scalar_select %p215, %s20, 1
      %p217 = scmp.lt.s32.totalorder %s214, 9
      %s218 = scalar_select %p217, %s214, 9
      %s219 = smul.addr %s218, 30
      %s220 = smul.addr %s216, 300
      %s221 = sadd.s32 %s219, %s220
      %s222 = smul.addr %s221, 4
      %s223 = scalar_lea.vmem %s0, %s222
      %s224 = sadd.s32 %s21, %s22
      %p225 = scmp.lt.s32.totalorder %s20, 1
      %s226 = scalar_select %p225, %s20, 1
      %p227 = scmp.lt.s32.totalorder %s21, 7
      %s228 = scalar_select %p227, %s21, 7
      %s229 = smul.addr %s228, 8
      %s230 = smul.addr %s226, 64
      %s231 = sadd.s32 %s229, %s230
      %s232 = smul.addr %s231, 4
      %s233 = scalar_lea.vmem %s2, %s232
      %p234 = scmp.lt.s32.totalorder %s20, 1
      %s235 = scalar_select %p234, %s20, 1
      %p236 = scmp.lt.s32.totalorder %s21, 7
      %s237 = scalar_select %p236, %s21, 7
      %s238 = smul.addr %s235, 8
      %s239 = sadd.s32 %s237, %s238
      %s240 = smul.addr %s239, 2
      %s241 = scalar_lea.vmem %s3, %s240
      %p242 = scmp.eq.s32.totalorder %s22, 0
      // Predicated region
      $region29: #{residual_block_3d.5} parent=27 // pred_check
        %p243 = pneg %p242
      $region30: #{residual_block_3d.5} parent=27 // pred_check_branch
        %245 = sbr.rel (%p243) target = $region32
      $region31: #{residual_block_3d.5} parent=27 // pred_region
        %246 = vst [vmem:[#allocation2] sm:$0xff] 0.0
        %247 = vst [vmem:[#allocation2 + $0x8] sm:$0xff] 0.0
        %248 = vst [vmem:[#allocation2 + $0x10] sm:$0xff] 0.0
        %249 = vst [vmem:[#allocation2 + $0x18] sm:$0xff] 0.0
        %250 = vst [vmem:[#allocation2 + $0x20] sm:$0xff] 0.0
        %251 = vst [vmem:[#allocation2 + $0x28] sm:$0xff] 0.0
        %252 = vst [vmem:[#allocation2 + $0x30] sm:$0xff] 0.0
        %253 = vst [vmem:[#allocation2 + $0x38] sm:$0xff] 0.0
      $region32: #{residual_block_3d.5} parent=27 // pred_fallthru
        _
      %v254 = vld [vmem:[%s223] sm:$0xff]
      %v255 = vld [vmem:[%s223 + $0x8] sm:$0xf]
      %v256 = vld [vmem:[%s223 + $0xc] sm:$0xff]
      %v257 = vld [vmem:[%s223 + $0x14] sm:$0xf]
      %v258 = vld [vmem:[%s223 + $0x18] sm:$0xff]
      %v259 = vld [vmem:[%s223 + $0x20] sm:$0xf]
      %v260 = vld [vmem:[%s223 + $0x24] sm:$0xff]
      %v261 = vld [vmem:[%s223 + $0x2c] sm:$0xf]
      %v262 = vld [vmem:[%s223 + $0x30] sm:$0xff]
      %v263 = vld [vmem:[%s223 + $0x38] sm:$0xf]
      %v264 = vld [vmem:[%s223 + $0x3c] sm:$0xff]
      %v265 = vld [vmem:[%s223 + $0x44] sm:$0xf]
      %v266 = vld [vmem:[%s223 + $0x48] sm:$0xff]
      %v267 = vld [vmem:[%s223 + $0x50] sm:$0xf]
      %v268 = vld [vmem:[%s223 + $0x54] sm:$0xff]
      %v269 = vld [vmem:[%s223 + $0x5c] sm:$0xf]
      %s270 = smul.u32 %s22, 1152
      %s271 = sshra.s32 %s270, 3
      %s272 = sand.u32 %s270, 7
      %s273 = smul.addr %s271, 4
      %s274 = scalar_lea.vmem %s1, %s273
      %v275 = vld [vmem:[%s274] sm:$0xf]
      %v276 = vld [vmem:[%s274 + $0x4] sm:$0xf]
      %v277 = vld [vmem:[%s274 + $0x8] sm:$0xf]
      %v278 = vld [vmem:[%s274 + $0xc] sm:$0xf]
      %v279 = vld [vmem:[%s274 + $0x10] sm:$0xf]
      %v280 = vld [vmem:[%s274 + $0x14] sm:$0xf]
      %v281 = vld [vmem:[%s274 + $0x18] sm:$0xf]
      %v282 = vld [vmem:[%s274 + $0x1c] sm:$0xf]
      %v283 = vld [vmem:[%s274 + $0x20] sm:$0xf]
      %v284 = vld [vmem:[%s274 + $0x24] sm:$0xf]
      %v285 = vld [vmem:[%s274 + $0x28] sm:$0xf]
      %v286 = vld [vmem:[%s274 + $0x2c] sm:$0xf]
      %v287 = vld [vmem:[%s274 + $0x30] sm:$0xf]
      %v288 = vld [vmem:[%s274 + $0x34] sm:$0xf]
      %v289 = vld [vmem:[%s274 + $0x38] sm:$0xf]
      %v290 = vld [vmem:[%s274 + $0x3c] sm:$0xf]
      %v291 = vld [vmem:[%s274 + $0x40] sm:$0xf]
      %v292 = vld [vmem:[%s274 + $0x44] sm:$0xf]
      %v293 = vld [vmem:[%s274 + $0x48] sm:$0xf]
      %v294 = vld [vmem:[%s274 + $0x4c] sm:$0xf]
      %v295 = vld [vmem:[%s274 + $0x50] sm:$0xf]
      %v296 = vld [vmem:[%s274 + $0x54] sm:$0xf]
      %v297 = vld [vmem:[%s274 + $0x58] sm:$0xf]
      %v298 = vld [vmem:[%s274 + $0x5c] sm:$0xf]
      %v299 = vld [vmem:[%s274 + $0x60] sm:$0xf]
      %v300 = vld [vmem:[%s274 + $0x64] sm:$0xf]
      %v301 = vld [vmem:[%s274 + $0x68] sm:$0xf]
      %v302 = vld [vmem:[%s274 + $0x6c] sm:$0xf]
      %v303 = vld [vmem:[%s274 + $0x70] sm:$0xf]
      %v304 = vld [vmem:[%s274 + $0x74] sm:$0xf]
      %v305 = vld [vmem:[%s274 + $0x78] sm:$0xf]
      %v306 = vld [vmem:[%s274 + $0x7c] sm:$0xf]
      %v307 = vld [vmem:[%s274 + $0x80] sm:$0xf]
      %v308 = vld [vmem:[%s274 + $0x84] sm:$0xf]
      %v309 = vld [vmem:[%s274 + $0x88] sm:$0xf]
      %v310 = vld [vmem:[%s274 + $0x8c] sm:$0xf]
      %v311 = vld [vmem:[%s274 + $0x90] sm:$0xf]
      %v312 = vld [vmem:[%s274 + $0x94] sm:$0xf]
      %v313 = vld [vmem:[%s274 + $0x98] sm:$0xf]
      %v314 = vld [vmem:[%s274 + $0x9c] sm:$0xf]
      %v315 = vld [vmem:[%s274 + $0xa0] sm:$0xf]
      %v316 = vld [vmem:[%s274 + $0xa4] sm:$0xf]
      %v317 = vld [vmem:[%s274 + $0xa8] sm:$0xf]
      %v318 = vld [vmem:[%s274 + $0xac] sm:$0xf]
      %v319 = vld [vmem:[%s274 + $0xb0] sm:$0xf]
      %v320 = vld [vmem:[%s274 + $0xb4] sm:$0xf]
      %v321 = vld [vmem:[%s274 + $0xb8] sm:$0xf]
      %v322 = vld [vmem:[%s274 + $0xbc] sm:$0xf]
      %v323 = vld [vmem:[%s223 + $0xc] sm:$0xff]
      %v324 = vld [vmem:[%s223 + $0x14] sm:$0xf]
      %v325 = vld [vmem:[%s223 + $0x18] sm:$0xff]
      %v326 = vld [vmem:[%s223 + $0x20] sm:$0xf]
      %v327 = vld [vmem:[%s223 + $0x24] sm:$0xff]
      %v328 = vld [vmem:[%s223 + $0x2c] sm:$0xf]
      %v329 = vld [vmem:[%s223 + $0x30] sm:$0xff]
      %v330 = vld [vmem:[%s223 + $0x38] sm:$0xf]
      %v331 = vld [vmem:[%s223 + $0x3c] sm:$0xff]
      %v332 = vld [vmem:[%s223 + $0x44] sm:$0xf]
      %v333 = vld [vmem:[%s223 + $0x48] sm:$0xff]
      %v334 = vld [vmem:[%s223 + $0x50] sm:$0xf]
      %v335 = vld [vmem:[%s223 + $0x54] sm:$0xff]
      %v336 = vld [vmem:[%s223 + $0x5c] sm:$0xf]
      %v337 = vld [vmem:[%s223 + $0x60] sm:$0xff]
      %v338 = vld [vmem:[%s223 + $0x68] sm:$0xf]
      %s339 = smul.u32 %s22, 3
      %s340 = sadd.s32 %s339, 1
      %s341 = smul.u32 %s340, 384
      %s342 = sshra.s32 %s341, 3
      %s343 = sand.u32 %s341, 7
      %s344 = smul.addr %s342, 4
      %s345 = scalar_lea.vmem %s1, %s344
      %v346 = vld [vmem:[%s345] sm:$0xf]
      %v347 = vld [vmem:[%s345 + $0x4] sm:$0xf]
      %v348 = vld [vmem:[%s345 + $0x8] sm:$0xf]
      %v349 = vld [vmem:[%s345 + $0xc] sm:$0xf]
      %v350 = vld [vmem:[%s345 + $0x10] sm:$0xf]
      %v351 = vld [vmem:[%s345 + $0x14] sm:$0xf]
      %v352 = vld [vmem:[%s345 + $0x18] sm:$0xf]
      %v353 = vld [vmem:[%s345 + $0x1c] sm:$0xf]
      %v354 = vld [vmem:[%s345 + $0x20] sm:$0xf]
      %v355 = vld [vmem:[%s345 + $0x24] sm:$0xf]
      %v356 = vld [vmem:[%s345 + $0x28] sm:$0xf]
      %v357 = vld [vmem:[%s345 + $0x2c] sm:$0xf]
      %v358 = vld [vmem:[%s345 + $0x30] sm:$0xf]
      %v359 = vld [vmem:[%s345 + $0x34] sm:$0xf]
      %v360 = vld [vmem:[%s345 + $0x38] sm:$0xf]
      %v361 = vld [vmem:[%s345 + $0x3c] sm:$0xf]
      %v362 = vld [vmem:[%s345 + $0x40] sm:$0xf]
      %v363 = vld [vmem:[%s345 + $0x44] sm:$0xf]
      %v364 = vld [vmem:[%s345 + $0x48] sm:$0xf]
      %v365 = vld [vmem:[%s345 + $0x4c] sm:$0xf]
      %v366 = vld [vmem:[%s345 + $0x50] sm:$0xf]
      %v367 = vld [vmem:[%s345 + $0x54] sm:$0xf]
      %v368 = vld [vmem:[%s345 + $0x58] sm:$0xf]
      %v369 = vld [vmem:[%s345 + $0x5c] sm:$0xf]
      %v370 = vld [vmem:[%s345 + $0x60] sm:$0xf]
      %v371 = vld [vmem:[%s345 + $0x64] sm:$0xf]
      %v372 = vld [vmem:[%s345 + $0x68] sm:$0xf]
      %v373 = vld [vmem:[%s345 + $0x6c] sm:$0xf]
      %v374 = vld [vmem:[%s345 + $0x70] sm:$0xf]
      %v375 = vld [vmem:[%s345 + $0x74] sm:$0xf]
      %v376 = vld [vmem:[%s345 + $0x78] sm:$0xf]
      %v377 = vld [vmem:[%s345 + $0x7c] sm:$0xf]
      %v378 = vld [vmem:[%s345 + $0x80] sm:$0xf]
      %v379 = vld [vmem:[%s345 + $0x84] sm:$0xf]
      %v380 = vld [vmem:[%s345 + $0x88] sm:$0xf]
      %v381 = vld [vmem:[%s345 + $0x8c] sm:$0xf]
      %v382 = vld [vmem:[%s345 + $0x90] sm:$0xf]
      %v383 = vld [vmem:[%s345 + $0x94] sm:$0xf]
      %v384 = vld [vmem:[%s345 + $0x98] sm:$0xf]
      %v385 = vld [vmem:[%s345 + $0x9c] sm:$0xf]
      %v386 = vld [vmem:[%s345 + $0xa0] sm:$0xf]
      %v387 = vld [vmem:[%s345 + $0xa4] sm:$0xf]
      %v388 = vld [vmem:[%s345 + $0xa8] sm:$0xf]
      %v389 = vld [vmem:[%s345 + $0xac] sm:$0xf]
      %v390 = vld [vmem:[%s345 + $0xb0] sm:$0xf]
      %v391 = vld [vmem:[%s345 + $0xb4] sm:$0xf]
      %v392 = vld [vmem:[%s345 + $0xb8] sm:$0xf]
      %v393 = vld [vmem:[%s345 + $0xbc] sm:$0xf]
      %v410 = vunpack.c.l.b16 %v323
      %v411 = vunpack.c.h.b16 %v323
      %v412 = vunpack.c.l.b16 %v324
      %v413 = vunpack.c.l.b16 %v325
      %v414 = vunpack.c.h.b16 %v325
      %v415 = vunpack.c.l.b16 %v326
      %v416 = vunpack.c.l.b16 %v327
      %v417 = vunpack.c.h.b16 %v327
      %v418 = vunpack.c.l.b16 %v328
      %v419 = vunpack.c.l.b16 %v329
      %v420 = vunpack.c.h.b16 %v329
      %v421 = vunpack.c.l.b16 %v330
      %v422 = vunpack.c.l.b16 %v331
      %v423 = vunpack.c.h.b16 %v331
      %v424 = vunpack.c.l.b16 %v332
      %v425 = vunpack.c.l.b16 %v333
      %v426 = vunpack.c.h.b16 %v333
      %v427 = vunpack.c.l.b16 %v334
      %v428 = vunpack.c.l.b16 %v335
      %v429 = vunpack.c.h.b16 %v335
      %v430 = vunpack.c.l.b16 %v336
      %v431 = vunpack.c.l.b16 %v337
      %v432 = vunpack.c.h.b16 %v337
      %v433 = vunpack.c.l.b16 %v338
      %v434 = vpack.c.b16 %v413, %v410
      %v435 = vpack.c.b16 %v414, %v411
      %v436 = vpack.c.b16 %v415, %v412
      %v437 = vpack.c.b16 %v419, %v416
      %v438 = vpack.c.b16 %v420, %v417
      %v439 = vpack.c.b16 %v421, %v418
      %v440 = vpack.c.b16 %v425, %v422
      %v441 = vpack.c.b16 %v426, %v423
      %v442 = vpack.c.b16 %v427, %v424
      %v443 = vpack.c.b16 %v431, %v428
      %v444 = vpack.c.b16 %v432, %v429
      %v445 = vpack.c.b16 %v433, %v430
      %v506 = vunpack.c.l.b16 %v346
      %v507 = vunpack.c.l.b16 %v347
      %v508 = vunpack.c.l.b16 %v348
      %v509 = vunpack.c.l.b16 %v349
      %v510 = vunpack.c.l.b16 %v350
      %v511 = vunpack.c.l.b16 %v351
      %v512 = vunpack.c.l.b16 %v352
      %v513 = vunpack.c.l.b16 %v353
      %v514 = vunpack.c.l.b16 %v354
      %v515 = vunpack.c.l.b16 %v355
      %v516 = vunpack.c.l.b16 %v356
      %v517 = vunpack.c.l.b16 %v357
      %v518 = vunpack.c.l.b16 %v358
      %v519 = vunpack.c.l.b16 %v359
      %v520 = vunpack.c.l.b16 %v360
      %v521 = vunpack.c.l.b16 %v361
      %v522 = vunpack.c.l.b16 %v362
      %v523 = vunpack.c.l.b16 %v363
      %v524 = vunpack.c.l.b16 %v364
      %v525 = vunpack.c.l.b16 %v365
      %v526 = vunpack.c.l.b16 %v366
      %v527 = vunpack.c.l.b16 %v367
      %v528 = vunpack.c.l.b16 %v368
      %v529 = vunpack.c.l.b16 %v369
      %v530 = vunpack.c.l.b16 %v370
      %v531 = vunpack.c.l.b16 %v371
      %v532 = vunpack.c.l.b16 %v372
      %v533 = vunpack.c.l.b16 %v373
      %v534 = vunpack.c.l.b16 %v374
      %v535 = vunpack.c.l.b16 %v375
      %v536 = vunpack.c.l.b16 %v376
      %v537 = vunpack.c.l.b16 %v377
      %v538 = vunpack.c.l.b16 %v378
      %v539 = vunpack.c.l.b16 %v379
      %v540 = vunpack.c.l.b16 %v380
      %v541 = vunpack.c.l.b16 %v381
      %v542 = vunpack.c.l.b16 %v382
      %v543 = vunpack.c.l.b16 %v383
      %v544 = vunpack.c.l.b16 %v384
      %v545 = vunpack.c.l.b16 %v385
      %v546 = vunpack.c.l.b16 %v386
      %v547 = vunpack.c.l.b16 %v387
      %v548 = vunpack.c.l.b16 %v388
      %v549 = vunpack.c.l.b16 %v389
      %v550 = vunpack.c.l.b16 %v390
      %v551 = vunpack.c.l.b16 %v391
      %v552 = vunpack.c.l.b16 %v392
      %v553 = vunpack.c.l.b16 %v393
      %v554 = vpack.c.b16 %v507, %v506
      %v555 = vpack.c.b16 %v509, %v508
      %v556 = vpack.c.b16 %v511, %v510
      %v557 = vpack.c.b16 %v513, %v512
      %v558 = vpack.c.b16 %v515, %v514
      %v559 = vpack.c.b16 %v517, %v516
      %v560 = vpack.c.b16 %v519, %v518
      %v561 = vpack.c.b16 %v521, %v520
      %v562 = vpack.c.b16 %v523, %v522
      %v563 = vpack.c.b16 %v525, %v524
      %v564 = vpack.c.b16 %v527, %v526
      %v565 = vpack.c.b16 %v529, %v528
      %v566 = vpack.c.b16 %v531, %v530
      %v567 = vpack.c.b16 %v533, %v532
      %v568 = vpack.c.b16 %v535, %v534
      %v569 = vpack.c.b16 %v537, %v536
      %v570 = vpack.c.b16 %v539, %v538
      %v571 = vpack.c.b16 %v541, %v540
      %v572 = vpack.c.b16 %v543, %v542
      %v573 = vpack.c.b16 %v545, %v544
      %v574 = vpack.c.b16 %v547, %v546
      %v575 = vpack.c.b16 %v549, %v548
      %v576 = vpack.c.b16 %v551, %v550
      %v577 = vpack.c.b16 %v553, %v552
      %602 = vmatpush.bf16.msra.mxu0 %v561
      %603 = vmatpush.bf16.msra.mxu0 %v560
      %604 = vmatpush.bf16.msra.mxu0 %v559
      %605 = vmatpush.bf16.msra.mxu0 %v558
      %606 = vmatpush.bf16.msra.mxu0 %v557
      %607 = vmatpush.bf16.msra.mxu0 %v556
      %608 = vmatpush.bf16.msra.mxu0 %v555
      %609 = vmatpush.bf16.msra.mxu0 %v554
      %610 = vmatmul.bf16.gmra.mxu0 %v434
      %v611 = vpop.f32.mrf.mxu0
      %v612 = vadd.f32 0.0, %v611
      %v613 = vpop.f32.mrf.mxu0
      %v614 = vadd.f32 0.0, %v613
      %615 = vmatmul.bf16.gmra.mxu0 %v437
      %v616 = vpop.f32.mrf.mxu0
      %v617 = vadd.f32 0.0, %v616
      %v618 = vpop.f32.mrf.mxu0
      %v619 = vadd.f32 0.0, %v618
      %620 = vmatmul.bf16.gmra.mxu0 %v440
      %v621 = vpop.f32.mrf.mxu0
      %v622 = vadd.f32 0.0, %v621
      %v623 = vpop.f32.mrf.mxu0
      %v624 = vadd.f32 0.0, %v623
      %625 = vmatmul.bf16.gmra.mxu0 %v443
      %v626 = vpop.f32.mrf.mxu0
      %v627 = vadd.f32 0.0, %v626
      %v628 = vpop.f32.mrf.mxu0
      %v629 = vadd.f32 0.0, %v628
      %630 = vdwg.mxu0
      %631 = vmatpush.bf16.msra.mxu0 %v569
      %632 = vmatpush.bf16.msra.mxu0 %v568
      %633 = vmatpush.bf16.msra.mxu0 %v567
      %634 = vmatpush.bf16.msra.mxu0 %v566
      %635 = vmatpush.bf16.msra.mxu0 %v565
      %636 = vmatpush.bf16.msra.mxu0 %v564
      %637 = vmatpush.bf16.msra.mxu0 %v563
      %638 = vmatpush.bf16.msra.mxu0 %v562
      %639 = vmatmul.bf16.gmra.mxu0 %v435
      %v640 = vpop.f32.mrf.mxu0
      %v641 = vadd.f32 %v612, %v640
      %v642 = vpop.f32.mrf.mxu0
      %v643 = vadd.f32 %v614, %v642
      %644 = vmatmul.bf16.gmra.mxu0 %v438
      %v645 = vpop.f32.mrf.mxu0
      %v646 = vadd.f32 %v617, %v645
      %v647 = vpop.f32.mrf.mxu0
      %v648 = vadd.f32 %v619, %v647
      %649 = vmatmul.bf16.gmra.mxu0 %v441
      %v650 = vpop.f32.mrf.mxu0
      %v651 = vadd.f32 %v622, %v650
      %v652 = vpop.f32.mrf.mxu0
      %v653 = vadd.f32 %v624, %v652
      %654 = vmatmul.bf16.gmra.mxu0 %v444
      %v655 = vpop.f32.mrf.mxu0
      %v656 = vadd.f32 %v627, %v655
      %v657 = vpop.f32.mrf.mxu0
      %v658 = vadd.f32 %v629, %v657
      %659 = vdwg.mxu0
      %660 = vmatpush.bf16.msra.mxu0 %v577
      %661 = vmatpush.bf16.msra.mxu0 %v576
      %662 = vmatpush.bf16.msra.mxu0 %v575
      %663 = vmatpush.bf16.msra.mxu0 %v574
      %664 = vmatpush.bf16.msra.mxu0 %v573
      %665 = vmatpush.bf16.msra.mxu0 %v572
      %666 = vmatpush.bf16.msra.mxu0 %v571
      %667 = vmatpush.bf16.msra.mxu0 %v570
      %668 = vmatmul.bf16.gmra.mxu0 %v436
      %v669 = vpop.f32.mrf.mxu0
      %v670 = vadd.f32 %v641, %v669
      %v671 = vpop.f32.mrf.mxu0
      %v672 = vadd.f32 %v643, %v671
      %673 = vmatmul.bf16.gmra.mxu0 %v439
      %v674 = vpop.f32.mrf.mxu0
      %v675 = vadd.f32 %v646, %v674
      %v676 = vpop.f32.mrf.mxu0
      %v677 = vadd.f32 %v648, %v676
      %678 = vmatmul.bf16.gmra.mxu0 %v442
      %v679 = vpop.f32.mrf.mxu0
      %v680 = vadd.f32 %v651, %v679
      %v681 = vpop.f32.mrf.mxu0
      %v682 = vadd.f32 %v653, %v681
      %683 = vmatmul.bf16.gmra.mxu0 %v445
      %v684 = vpop.f32.mrf.mxu0
      %v685 = vadd.f32 %v656, %v684
      %v686 = vpop.f32.mrf.mxu0
      %v687 = vadd.f32 %v658, %v686
      %688 = vdwg.mxu0
      %v705 = vunpack.c.l.b16 %v254
      %v706 = vunpack.c.h.b16 %v254
      %v707 = vunpack.c.l.b16 %v255
      %v708 = vunpack.c.l.b16 %v256
      %v709 = vunpack.c.h.b16 %v256
      %v710 = vunpack.c.l.b16 %v257
      %v711 = vunpack.c.l.b16 %v258
      %v712 = vunpack.c.h.b16 %v258
      %v713 = vunpack.c.l.b16 %v259
      %v714 = vunpack.c.l.b16 %v260
      %v715 = vunpack.c.h.b16 %v260
      %v716 = vunpack.c.l.b16 %v261
      %v717 = vunpack.c.l.b16 %v262
      %v718 = vunpack.c.h.b16 %v262
      %v719 = vunpack.c.l.b16 %v263
      %v720 = vunpack.c.l.b16 %v264
      %v721 = vunpack.c.h.b16 %v264
      %v722 = vunpack.c.l.b16 %v265
      %v723 = vunpack.c.l.b16 %v266
      %v724 = vunpack.c.h.b16 %v266
      %v725 = vunpack.c.l.b16 %v267
      %v726 = vunpack.c.l.b16 %v268
      %v727 = vunpack.c.h.b16 %v268
      %v728 = vunpack.c.l.b16 %v269
      %v729 = vpack.c.b16 %v708, %v705
      %v730 = vpack.c.b16 %v709, %v706
      %v731 = vpack.c.b16 %v710, %v707
      %v732 = vpack.c.b16 %v714, %v711
      %v733 = vpack.c.b16 %v715, %v712
      %v734 = vpack.c.b16 %v716, %v713
      %v735 = vpack.c.b16 %v720, %v717
      %v736 = vpack.c.b16 %v721, %v718
      %v737 = vpack.c.b16 %v722, %v719
      %v738 = vpack.c.b16 %v726, %v723
      %v739 = vpack.c.b16 %v727, %v724
      %v740 = vpack.c.b16 %v728, %v725
      %v801 = vunpack.c.l.b16 %v275
      %v802 = vunpack.c.l.b16 %v276
      %v803 = vunpack.c.l.b16 %v277
      %v804 = vunpack.c.l.b16 %v278
      %v805 = vunpack.c.l.b16 %v279
      %v806 = vunpack.c.l.b16 %v280
      %v807 = vunpack.c.l.b16 %v281
      %v808 = vunpack.c.l.b16 %v282
      %v809 = vunpack.c.l.b16 %v283
      %v810 = vunpack.c.l.b16 %v284
      %v811 = vunpack.c.l.b16 %v285
      %v812 = vunpack.c.l.b16 %v286
      %v813 = vunpack.c.l.b16 %v287
      %v814 = vunpack.c.l.b16 %v288
      %v815 = vunpack.c.l.b16 %v289
      %v816 = vunpack.c.l.b16 %v290
      %v817 = vunpack.c.l.b16 %v291
      %v818 = vunpack.c.l.b16 %v292
      %v819 = vunpack.c.l.b16 %v293
      %v820 = vunpack.c.l.b16 %v294
      %v821 = vunpack.c.l.b16 %v295
      %v822 = vunpack.c.l.b16 %v296
      %v823 = vunpack.c.l.b16 %v297
      %v824 = vunpack.c.l.b16 %v298
      %v825 = vunpack.c.l.b16 %v299
      %v826 = vunpack.c.l.b16 %v300
      %v827 = vunpack.c.l.b16 %v301
      %v828 = vunpack.c.l.b16 %v302
      %v829 = vunpack.c.l.b16 %v303
      %v830 = vunpack.c.l.b16 %v304
      %v831 = vunpack.c.l.b16 %v305
      %v832 = vunpack.c.l.b16 %v306
      %v833 = vunpack.c.l.b16 %v307
      %v834 = vunpack.c.l.b16 %v308
      %v835 = vunpack.c.l.b16 %v309
      %v836 = vunpack.c.l.b16 %v310
      %v837 = vunpack.c.l.b16 %v311
      %v838 = vunpack.c.l.b16 %v312
      %v839 = vunpack.c.l.b16 %v313
      %v840 = vunpack.c.l.b16 %v314
      %v841 = vunpack.c.l.b16 %v315
      %v842 = vunpack.c.l.b16 %v316
      %v843 = vunpack.c.l.b16 %v317
      %v844 = vunpack.c.l.b16 %v318
      %v845 = vunpack.c.l.b16 %v319
      %v846 = vunpack.c.l.b16 %v320
      %v847 = vunpack.c.l.b16 %v321
      %v848 = vunpack.c.l.b16 %v322
      %v849 = vpack.c.b16 %v802, %v801
      %v850 = vpack.c.b16 %v804, %v803
      %v851 = vpack.c.b16 %v806, %v805
      %v852 = vpack.c.b16 %v808, %v807
      %v853 = vpack.c.b16 %v810, %v809
      %v854 = vpack.c.b16 %v812, %v811
      %v855 = vpack.c.b16 %v814, %v813
      %v856 = vpack.c.b16 %v816, %v815
      %v857 = vpack.c.b16 %v818, %v817
      %v858 = vpack.c.b16 %v820, %v819
      %v859 = vpack.c.b16 %v822, %v821
      %v860 = vpack.c.b16 %v824, %v823
      %v861 = vpack.c.b16 %v826, %v825
      %v862 = vpack.c.b16 %v828, %v827
      %v863 = vpack.c.b16 %v830, %v829
      %v864 = vpack.c.b16 %v832, %v831
      %v865 = vpack.c.b16 %v834, %v833
      %v866 = vpack.c.b16 %v836, %v835
      %v867 = vpack.c.b16 %v838, %v837
      %v868 = vpack.c.b16 %v840, %v839
      %v869 = vpack.c.b16 %v842, %v841
      %v870 = vpack.c.b16 %v844, %v843
      %v871 = vpack.c.b16 %v846, %v845
      %v872 = vpack.c.b16 %v848, %v847
      %897 = vmatpush.bf16.msra.mxu0 %v856
      %898 = vmatpush.bf16.msra.mxu0 %v855
      %899 = vmatpush.bf16.msra.mxu0 %v854
      %900 = vmatpush.bf16.msra.mxu0 %v853
      %901 = vmatpush.bf16.msra.mxu0 %v852
      %902 = vmatpush.bf16.msra.mxu0 %v851
      %903 = vmatpush.bf16.msra.mxu0 %v850
      %904 = vmatpush.bf16.msra.mxu0 %v849
      %905 = vmatmul.bf16.gmra.mxu0 %v729
      %v906 = vpop.f32.mrf.mxu0
      %v907 = vadd.f32 %v670, %v906
      %v908 = vpop.f32.mrf.mxu0
      %v909 = vadd.f32 %v672, %v908
      %910 = vmatmul.bf16.gmra.mxu0 %v732
      %v911 = vpop.f32.mrf.mxu0
      %v912 = vadd.f32 %v675, %v911
      %v913 = vpop.f32.mrf.mxu0
      %v914 = vadd.f32 %v677, %v913
      %915 = vmatmul.bf16.gmra.mxu0 %v735
      %v916 = vpop.f32.mrf.mxu0
      %v917 = vadd.f32 %v680, %v916
      %v918 = vpop.f32.mrf.mxu0
      %v919 = vadd.f32 %v682, %v918
      %920 = vmatmul.bf16.gmra.mxu0 %v738
      %v921 = vpop.f32.mrf.mxu0
      %v922 = vadd.f32 %v685, %v921
      %v923 = vpop.f32.mrf.mxu0
      %v924 = vadd.f32 %v687, %v923
      %925 = vdwg.mxu0
      %926 = vmatpush.bf16.msra.mxu0 %v864
      %927 = vmatpush.bf16.msra.mxu0 %v863
      %928 = vmatpush.bf16.msra.mxu0 %v862
      %929 = vmatpush.bf16.msra.mxu0 %v861
      %930 = vmatpush.bf16.msra.mxu0 %v860
      %931 = vmatpush.bf16.msra.mxu0 %v859
      %932 = vmatpush.bf16.msra.mxu0 %v858
      %933 = vmatpush.bf16.msra.mxu0 %v857
      %934 = vmatmul.bf16.gmra.mxu0 %v730
      %v935 = vpop.f32.mrf.mxu0
      %v936 = vadd.f32 %v907, %v935
      %v937 = vpop.f32.mrf.mxu0
      %v938 = vadd.f32 %v909, %v937
      %939 = vmatmul.bf16.gmra.mxu0 %v733
      %v940 = vpop.f32.mrf.mxu0
      %v941 = vadd.f32 %v912, %v940
      %v942 = vpop.f32.mrf.mxu0
      %v943 = vadd.f32 %v914, %v942
      %944 = vmatmul.bf16.gmra.mxu0 %v736
      %v945 = vpop.f32.mrf.mxu0
      %v946 = vadd.f32 %v917, %v945
      %v947 = vpop.f32.mrf.mxu0
      %v948 = vadd.f32 %v919, %v947
      %949 = vmatmul.bf16.gmra.mxu0 %v739
      %v950 = vpop.f32.mrf.mxu0
      %v951 = vadd.f32 %v922, %v950
      %v952 = vpop.f32.mrf.mxu0
      %v953 = vadd.f32 %v924, %v952
      %954 = vdwg.mxu0
      %955 = vmatpush.bf16.msra.mxu0 %v872
      %956 = vmatpush.bf16.msra.mxu0 %v871
      %957 = vmatpush.bf16.msra.mxu0 %v870
      %958 = vmatpush.bf16.msra.mxu0 %v869
      %959 = vmatpush.bf16.msra.mxu0 %v868
      %960 = vmatpush.bf16.msra.mxu0 %v867
      %961 = vmatpush.bf16.msra.mxu0 %v866
      %962 = vmatpush.bf16.msra.mxu0 %v865
      %963 = vmatmul.bf16.gmra.mxu0 %v731
      %v964 = vpop.f32.mrf.mxu0
      %v965 = vadd.f32 %v936, %v964
      %v966 = vpop.f32.mrf.mxu0
      %v967 = vadd.f32 %v938, %v966
      %968 = vmatmul.bf16.gmra.mxu0 %v734
      %v969 = vpop.f32.mrf.mxu0
      %v970 = vadd.f32 %v941, %v969
      %v971 = vpop.f32.mrf.mxu0
      %v972 = vadd.f32 %v943, %v971
      %973 = vmatmul.bf16.gmra.mxu0 %v737
      %v974 = vpop.f32.mrf.mxu0
      %v975 = vadd.f32 %v946, %v974
      %v976 = vpop.f32.mrf.mxu0
      %v977 = vadd.f32 %v948, %v976
      %978 = vmatmul.bf16.gmra.mxu0 %v740
      %v979 = vpop.f32.mrf.mxu0
      %v980 = vadd.f32 %v951, %v979
      %v981 = vpop.f32.mrf.mxu0
      %v982 = vadd.f32 %v953, %v981
      %983 = vdwg.mxu0
      %v984 = vld [vmem:[%s223 + $0x18] sm:$0xff]
      %v985 = vld [vmem:[%s223 + $0x20] sm:$0xf]
      %v986 = vld [vmem:[%s223 + $0x24] sm:$0xff]
      %v987 = vld [vmem:[%s223 + $0x2c] sm:$0xf]
      %v988 = vld [vmem:[%s223 + $0x30] sm:$0xff]
      %v989 = vld [vmem:[%s223 + $0x38] sm:$0xf]
      %v990 = vld [vmem:[%s223 + $0x3c] sm:$0xff]
      %v991 = vld [vmem:[%s223 + $0x44] sm:$0xf]
      %v992 = vld [vmem:[%s223 + $0x48] sm:$0xff]
      %v993 = vld [vmem:[%s223 + $0x50] sm:$0xf]
      %v994 = vld [vmem:[%s223 + $0x54] sm:$0xff]
      %v995 = vld [vmem:[%s223 + $0x5c] sm:$0xf]
      %v996 = vld [vmem:[%s223 + $0x60] sm:$0xff]
      %v997 = vld [vmem:[%s223 + $0x68] sm:$0xf]
      %v998 = vld [vmem:[%s223 + $0x6c] sm:$0xff]
      %v999 = vld [vmem:[%s223 + $0x74] sm:$0xf]
      %s1000 = sadd.s32 %s339, 2
      %s1001 = smul.u32 %s1000, 384
      %s1002 = sshra.s32 %s1001, 3
      %s1003 = sand.u32 %s1001, 7
      %s1004 = smul.addr %s1002, 4
      %s1005 = scalar_lea.vmem %s1, %s1004
      %v1006 = vld [vmem:[%s1005] sm:$0xf]
      %v1007 = vld [vmem:[%s1005 + $0x4] sm:$0xf]
      %v1008 = vld [vmem:[%s1005 + $0x8] sm:$0xf]
      %v1009 = vld [vmem:[%s1005 + $0xc] sm:$0xf]
      %v1010 = vld [vmem:[%s1005 + $0x10] sm:$0xf]
      %v1011 = vld [vmem:[%s1005 + $0x14] sm:$0xf]
      %v1012 = vld [vmem:[%s1005 + $0x18] sm:$0xf]
      %v1013 = vld [vmem:[%s1005 + $0x1c] sm:$0xf]
      %v1014 = vld [vmem:[%s1005 + $0x20] sm:$0xf]
      %v1015 = vld [vmem:[%s1005 + $0x24] sm:$0xf]
      %v1016 = vld [vmem:[%s1005 + $0x28] sm:$0xf]
      %v1017 = vld [vmem:[%s1005 + $0x2c] sm:$0xf]
      %v1018 = vld [vmem:[%s1005 + $0x30] sm:$0xf]
      %v1019 = vld [vmem:[%s1005 + $0x34] sm:$0xf]
      %v1020 = vld [vmem:[%s1005 + $0x38] sm:$0xf]
      %v1021 = vld [vmem:[%s1005 + $0x3c] sm:$0xf]
      %v1022 = vld [vmem:[%s1005 + $0x40] sm:$0xf]
      %v1023 = vld [vmem:[%s1005 + $0x44] sm:$0xf]
      %v1024 = vld [vmem:[%s1005 + $0x48] sm:$0xf]
      %v1025 = vld [vmem:[%s1005 + $0x4c] sm:$0xf]
      %v1026 = vld [vmem:[%s1005 + $0x50] sm:$0xf]
      %v1027 = vld [vmem:[%s1005 + $0x54] sm:$0xf]
      %v1028 = vld [vmem:[%s1005 + $0x58] sm:$0xf]
      %v1029 = vld [vmem:[%s1005 + $0x5c] sm:$0xf]
      %v1030 = vld [vmem:[%s1005 + $0x60] sm:$0xf]
      %v1031 = vld [vmem:[%s1005 + $0x64] sm:$0xf]
      %v1032 = vld [vmem:[%s1005 + $0x68] sm:$0xf]
      %v1033 = vld [vmem:[%s1005 + $0x6c] sm:$0xf]
      %v1034 = vld [vmem:[%s1005 + $0x70] sm:$0xf]
      %v1035 = vld [vmem:[%s1005 + $0x74] sm:$0xf]
      %v1036 = vld [vmem:[%s1005 + $0x78] sm:$0xf]
      %v1037 = vld [vmem:[%s1005 + $0x7c] sm:$0xf]
      %v1038 = vld [vmem:[%s1005 + $0x80] sm:$0xf]
      %v1039 = vld [vmem:[%s1005 + $0x84] sm:$0xf]
      %v1040 = vld [vmem:[%s1005 + $0x88] sm:$0xf]
      %v1041 = vld [vmem:[%s1005 + $0x8c] sm:$0xf]
      %v1042 = vld [vmem:[%s1005 + $0x90] sm:$0xf]
      %v1043 = vld [vmem:[%s1005 + $0x94] sm:$0xf]
      %v1044 = vld [vmem:[%s1005 + $0x98] sm:$0xf]
      %v1045 = vld [vmem:[%s1005 + $0x9c] sm:$0xf]
      %v1046 = vld [vmem:[%s1005 + $0xa0] sm:$0xf]
      %v1047 = vld [vmem:[%s1005 + $0xa4] sm:$0xf]
      %v1048 = vld [vmem:[%s1005 + $0xa8] sm:$0xf]
      %v1049 = vld [vmem:[%s1005 + $0xac] sm:$0xf]
      %v1050 = vld [vmem:[%s1005 + $0xb0] sm:$0xf]
      %v1051 = vld [vmem:[%s1005 + $0xb4] sm:$0xf]
      %v1052 = vld [vmem:[%s1005 + $0xb8] sm:$0xf]
      %v1053 = vld [vmem:[%s1005 + $0xbc] sm:$0xf]
      %v1070 = vunpack.c.l.b16 %v984
      %v1071 = vunpack.c.h.b16 %v984
      %v1072 = vunpack.c.l.b16 %v985
      %v1073 = vunpack.c.l.b16 %v986
      %v1074 = vunpack.c.h.b16 %v986
      %v1075 = vunpack.c.l.b16 %v987
      %v1076 = vunpack.c.l.b16 %v988
      %v1077 = vunpack.c.h.b16 %v988
      %v1078 = vunpack.c.l.b16 %v989
      %v1079 = vunpack.c.l.b16 %v990
      %v1080 = vunpack.c.h.b16 %v990
      %v1081 = vunpack.c.l.b16 %v991
      %v1082 = vunpack.c.l.b16 %v992
      %v1083 = vunpack.c.h.b16 %v992
      %v1084 = vunpack.c.l.b16 %v993
      %v1085 = vunpack.c.l.b16 %v994
      %v1086 = vunpack.c.h.b16 %v994
      %v1087 = vunpack.c.l.b16 %v995
      %v1088 = vunpack.c.l.b16 %v996
      %v1089 = vunpack.c.h.b16 %v996
      %v1090 = vunpack.c.l.b16 %v997
      %v1091 = vunpack.c.l.b16 %v998
      %v1092 = vunpack.c.h.b16 %v998
      %v1093 = vunpack.c.l.b16 %v999
      %v1094 = vpack.c.b16 %v1073, %v1070
      %v1095 = vpack.c.b16 %v1074, %v1071
      %v1096 = vpack.c.b16 %v1075, %v1072
      %v1097 = vpack.c.b16 %v1079, %v1076
      %v1098 = vpack.c.b16 %v1080, %v1077
      %v1099 = vpack.c.b16 %v1081, %v1078
      %v1100 = vpack.c.b16 %v1085, %v1082
      %v1101 = vpack.c.b16 %v1086, %v1083
      %v1102 = vpack.c.b16 %v1087, %v1084
      %v1103 = vpack.c.b16 %v1091, %v1088
      %v1104 = vpack.c.b16 %v1092, %v1089
      %v1105 = vpack.c.b16 %v1093, %v1090
      %v1166 = vunpack.c.l.b16 %v1006
      %v1167 = vunpack.c.l.b16 %v1007
      %v1168 = vunpack.c.l.b16 %v1008
      %v1169 = vunpack.c.l.b16 %v1009
      %v1170 = vunpack.c.l.b16 %v1010
      %v1171 = vunpack.c.l.b16 %v1011
      %v1172 = vunpack.c.l.b16 %v1012
      %v1173 = vunpack.c.l.b16 %v1013
      %v1174 = vunpack.c.l.b16 %v1014
      %v1175 = vunpack.c.l.b16 %v1015
      %v1176 = vunpack.c.l.b16 %v1016
      %v1177 = vunpack.c.l.b16 %v1017
      %v1178 = vunpack.c.l.b16 %v1018
      %v1179 = vunpack.c.l.b16 %v1019
      %v1180 = vunpack.c.l.b16 %v1020
      %v1181 = vunpack.c.l.b16 %v1021
      %v1182 = vunpack.c.l.b16 %v1022
      %v1183 = vunpack.c.l.b16 %v1023
      %v1184 = vunpack.c.l.b16 %v1024
      %v1185 = vunpack.c.l.b16 %v1025
      %v1186 = vunpack.c.l.b16 %v1026
      %v1187 = vunpack.c.l.b16 %v1027
      %v1188 = vunpack.c.l.b16 %v1028
      %v1189 = vunpack.c.l.b16 %v1029
      %v1190 = vunpack.c.l.b16 %v1030
      %v1191 = vunpack.c.l.b16 %v1031
      %v1192 = vunpack.c.l.b16 %v1032
      %v1193 = vunpack.c.l.b16 %v1033
      %v1194 = vunpack.c.l.b16 %v1034
      %v1195 = vunpack.c.l.b16 %v1035
      %v1196 = vunpack.c.l.b16 %v1036
      %v1197 = vunpack.c.l.b16 %v1037
      %v1198 = vunpack.c.l.b16 %v1038
      %v1199 = vunpack.c.l.b16 %v1039
      %v1200 = vunpack.c.l.b16 %v1040
      %v1201 = vunpack.c.l.b16 %v1041
      %v1202 = vunpack.c.l.b16 %v1042
      %v1203 = vunpack.c.l.b16 %v1043
      %v1204 = vunpack.c.l.b16 %v1044
      %v1205 = vunpack.c.l.b16 %v1045
      %v1206 = vunpack.c.l.b16 %v1046
      %v1207 = vunpack.c.l.b16 %v1047
      %v1208 = vunpack.c.l.b16 %v1048
      %v1209 = vunpack.c.l.b16 %v1049
      %v1210 = vunpack.c.l.b16 %v1050
      %v1211 = vunpack.c.l.b16 %v1051
      %v1212 = vunpack.c.l.b16 %v1052
      %v1213 = vunpack.c.l.b16 %v1053
      %v1214 = vpack.c.b16 %v1167, %v1166
      %v1215 = vpack.c.b16 %v1169, %v1168
      %v1216 = vpack.c.b16 %v1171, %v1170
      %v1217 = vpack.c.b16 %v1173, %v1172
      %v1218 = vpack.c.b16 %v1175, %v1174
      %v1219 = vpack.c.b16 %v1177, %v1176
      %v1220 = vpack.c.b16 %v1179, %v1178
      %v1221 = vpack.c.b16 %v1181, %v1180
      %v1222 = vpack.c.b16 %v1183, %v1182
      %v1223 = vpack.c.b16 %v1185, %v1184
      %v1224 = vpack.c.b16 %v1187, %v1186
      %v1225 = vpack.c.b16 %v1189, %v1188
      %v1226 = vpack.c.b16 %v1191, %v1190
      %v1227 = vpack.c.b16 %v1193, %v1192
      %v1228 = vpack.c.b16 %v1195, %v1194
      %v1229 = vpack.c.b16 %v1197, %v1196
      %v1230 = vpack.c.b16 %v1199, %v1198
      %v1231 = vpack.c.b16 %v1201, %v1200
      %v1232 = vpack.c.b16 %v1203, %v1202
      %v1233 = vpack.c.b16 %v1205, %v1204
      %v1234 = vpack.c.b16 %v1207, %v1206
      %v1235 = vpack.c.b16 %v1209, %v1208
      %v1236 = vpack.c.b16 %v1211, %v1210
      %v1237 = vpack.c.b16 %v1213, %v1212
      %1262 = vmatpush.bf16.msra.mxu0 %v1221
      %1263 = vmatpush.bf16.msra.mxu0 %v1220
      %1264 = vmatpush.bf16.msra.mxu0 %v1219
      %1265 = vmatpush.bf16.msra.mxu0 %v1218
      %1266 = vmatpush.bf16.msra.mxu0 %v1217
      %1267 = vmatpush.bf16.msra.mxu0 %v1216
      %1268 = vmatpush.bf16.msra.mxu0 %v1215
      %1269 = vmatpush.bf16.msra.mxu0 %v1214
      %1270 = vmatmul.bf16.gmra.mxu0 %v1094
      %v1271 = vpop.f32.mrf.mxu0
      %v1272 = vadd.f32 0.0, %v1271
      %v1273 = vpop.f32.mrf.mxu0
      %v1274 = vadd.f32 0.0, %v1273
      %1275 = vmatmul.bf16.gmra.mxu0 %v1097
      %v1276 = vpop.f32.mrf.mxu0
      %v1277 = vadd.f32 0.0, %v1276
      %v1278 = vpop.f32.mrf.mxu0
      %v1279 = vadd.f32 0.0, %v1278
      %1280 = vmatmul.bf16.gmra.mxu0 %v1100
      %v1281 = vpop.f32.mrf.mxu0
      %v1282 = vadd.f32 0.0, %v1281
      %v1283 = vpop.f32.mrf.mxu0
      %v1284 = vadd.f32 0.0, %v1283
      %1285 = vmatmul.bf16.gmra.mxu0 %v1103
      %v1286 = vpop.f32.mrf.mxu0
      %v1287 = vadd.f32 0.0, %v1286
      %v1288 = vpop.f32.mrf.mxu0
      %v1289 = vadd.f32 0.0, %v1288
      %1290 = vdwg.mxu0
      %1291 = vmatpush.bf16.msra.mxu0 %v1229
      %1292 = vmatpush.bf16.msra.mxu0 %v1228
      %1293 = vmatpush.bf16.msra.mxu0 %v1227
      %1294 = vmatpush.bf16.msra.mxu0 %v1226
      %1295 = vmatpush.bf16.msra.mxu0 %v1225
      %1296 = vmatpush.bf16.msra.mxu0 %v1224
      %1297 = vmatpush.bf16.msra.mxu0 %v1223
      %1298 = vmatpush.bf16.msra.mxu0 %v1222
      %1299 = vmatmul.bf16.gmra.mxu0 %v1095
      %v1300 = vpop.f32.mrf.mxu0
      %v1301 = vadd.f32 %v1272, %v1300
      %v1302 = vpop.f32.mrf.mxu0
      %v1303 = vadd.f32 %v1274, %v1302
      %1304 = vmatmul.bf16.gmra.mxu0 %v1098
      %v1305 = vpop.f32.mrf.mxu0
      %v1306 = vadd.f32 %v1277, %v1305
      %v1307 = vpop.f32.mrf.mxu0
      %v1308 = vadd.f32 %v1279, %v1307
      %1309 = vmatmul.bf16.gmra.mxu0 %v1101
      %v1310 = vpop.f32.mrf.mxu0
      %v1311 = vadd.f32 %v1282, %v1310
      %v1312 = vpop.f32.mrf.mxu0
      %v1313 = vadd.f32 %v1284, %v1312
      %1314 = vmatmul.bf16.gmra.mxu0 %v1104
      %v1315 = vpop.f32.mrf.mxu0
      %v1316 = vadd.f32 %v1287, %v1315
      %v1317 = vpop.f32.mrf.mxu0
      %v1318 = vadd.f32 %v1289, %v1317
      %1319 = vdwg.mxu0
      %1320 = vmatpush.bf16.msra.mxu0 %v1237
      %1321 = vmatpush.bf16.msra.mxu0 %v1236
      %1322 = vmatpush.bf16.msra.mxu0 %v1235
      %1323 = vmatpush.bf16.msra.mxu0 %v1234
      %1324 = vmatpush.bf16.msra.mxu0 %v1233
      %1325 = vmatpush.bf16.msra.mxu0 %v1232
      %1326 = vmatpush.bf16.msra.mxu0 %v1231
      %1327 = vmatpush.bf16.msra.mxu0 %v1230
      %1328 = vmatmul.bf16.gmra.mxu0 %v1096
      %v1329 = vpop.f32.mrf.mxu0
      %v1330 = vadd.f32 %v1301, %v1329
      %v1331 = vpop.f32.mrf.mxu0
      %v1332 = vadd.f32 %v1303, %v1331
      %1333 = vmatmul.bf16.gmra.mxu0 %v1099
      %v1334 = vpop.f32.mrf.mxu0
      %v1335 = vadd.f32 %v1306, %v1334
      %v1336 = vpop.f32.mrf.mxu0
      %v1337 = vadd.f32 %v1308, %v1336
      %1338 = vmatmul.bf16.gmra.mxu0 %v1102
      %v1339 = vpop.f32.mrf.mxu0
      %v1340 = vadd.f32 %v1311, %v1339
      %v1341 = vpop.f32.mrf.mxu0
      %v1342 = vadd.f32 %v1313, %v1341
      %1343 = vmatmul.bf16.gmra.mxu0 %v1105
      %v1344 = vpop.f32.mrf.mxu0
      %v1345 = vadd.f32 %v1316, %v1344
      %v1346 = vpop.f32.mrf.mxu0
      %v1347 = vadd.f32 %v1318, %v1346
      %1348 = vdwg.mxu0
      %v1349 = vadd.f32 %v965, %v1330
      %v1350 = vadd.f32 %v967, %v1332
      %v1351 = vadd.f32 %v970, %v1335
      %v1352 = vadd.f32 %v972, %v1337
      %v1353 = vadd.f32 %v975, %v1340
      %v1354 = vadd.f32 %v977, %v1342
      %v1355 = vadd.f32 %v980, %v1345
      %v1356 = vadd.f32 %v982, %v1347
      %v1357 = vld [vmem:[#allocation2] sm:$0xff]
      %v1358 = vld [vmem:[#allocation2 + $0x8] sm:$0xff]
      %v1359 = vld [vmem:[#allocation2 + $0x10] sm:$0xff]
      %v1360 = vld [vmem:[#allocation2 + $0x18] sm:$0xff]
      %v1361 = vld [vmem:[#allocation2 + $0x20] sm:$0xff]
      %v1362 = vld [vmem:[#allocation2 + $0x28] sm:$0xff]
      %v1363 = vld [vmem:[#allocation2 + $0x30] sm:$0xff]
      %v1364 = vld [vmem:[#allocation2 + $0x38] sm:$0xff]
      %v1365 = vadd.f32 %v1357, %v1349
      %v1366 = vadd.f32 %v1358, %v1350
      %v1367 = vadd.f32 %v1359, %v1351
      %v1368 = vadd.f32 %v1360, %v1352
      %v1369 = vadd.f32 %v1361, %v1353
      %v1370 = vadd.f32 %v1362, %v1354
      %v1371 = vadd.f32 %v1363, %v1355
      %v1372 = vadd.f32 %v1364, %v1356
      %1373 = vst [vmem:[#allocation2] sm:$0xff] %v1365
      %1374 = vst [vmem:[#allocation2 + $0x8] sm:$0xff] %v1366
      %1375 = vst [vmem:[#allocation2 + $0x10] sm:$0xff] %v1367
      %1376 = vst [vmem:[#allocation2 + $0x18] sm:$0xff] %v1368
      %1377 = vst [vmem:[#allocation2 + $0x20] sm:$0xff] %v1369
      %1378 = vst [vmem:[#allocation2 + $0x28] sm:$0xff] %v1370
      %1379 = vst [vmem:[#allocation2 + $0x30] sm:$0xff] %v1371
      %1380 = vst [vmem:[#allocation2 + $0x38] sm:$0xff] %v1372
      %p1381 = scmp.eq.s32.totalorder %s22, 2
      // Predicated region
      $region33: #{residual_block_3d.5} parent=27 // pred_check
        %p1382 = pneg %p1381
      $region34: #{residual_block_3d.5} parent=27 // pred_check_branch
        %1384 = sbr.rel (%p1382) target = $region36
      $region35: #{residual_block_3d.5} parent=27 // pred_region
        %v1385 = vld [vmem:[#allocation2] sm:$0xff]
        %v1386 = vld [vmem:[#allocation2 + $0x8] sm:$0xff]
        %v1387 = vld [vmem:[#allocation2 + $0x10] sm:$0xff]
        %v1388 = vld [vmem:[#allocation2 + $0x18] sm:$0xff]
        %v1389 = vld [vmem:[#allocation2 + $0x20] sm:$0xff]
        %v1390 = vld [vmem:[#allocation2 + $0x28] sm:$0xff]
        %v1391 = vld [vmem:[#allocation2 + $0x30] sm:$0xff]
        %v1392 = vld [vmem:[#allocation2 + $0x38] sm:$0xff]
        %v1393 = vpack.c.bf16 %v1385, %v1385
        %v1394 = vpack.c.bf16 %v1386, %v1386
        %v1395 = vpack.c.bf16 %v1387, %v1387
        %v1396 = vpack.c.bf16 %v1388, %v1388
        %v1397 = vpack.c.bf16 %v1389, %v1389
        %v1398 = vpack.c.bf16 %v1390, %v1390
        %v1399 = vpack.c.bf16 %v1391, %v1391
        %v1400 = vpack.c.bf16 %v1392, %v1392
        %1401 = vst [vmem:[%s233] sm:$0xf] %v1393
        %1402 = vst [vmem:[%s233 + $0x4] sm:$0xf] %v1394
        %1403 = vst [vmem:[%s233 + $0x8] sm:$0xf] %v1395
        %1404 = vst [vmem:[%s233 + $0xc] sm:$0xf] %v1396
        %1405 = vst [vmem:[%s233 + $0x10] sm:$0xf] %v1397
        %1406 = vst [vmem:[%s233 + $0x14] sm:$0xf] %v1398
        %1407 = vst [vmem:[%s233 + $0x18] sm:$0xf] %v1399
        %1408 = vst [vmem:[%s233 + $0x1c] sm:$0xf] %v1400
        %v1409 = vadd.f32 %v1385, %v1386
        %v1410 = vadd.f32 %v1409, %v1387
        %v1411 = vadd.f32 %v1410, %v1388
        %v1412 = vadd.f32 %v1411, %v1389
        %v1413 = vadd.f32 %v1412, %v1390
        %v1414 = vadd.f32 %v1413, %v1391
        %v1415 = vadd.f32 %v1414, %v1392
        %v1416 = vrot.slane %v1415, 4
        %v1417 = vadd.f32 %v1415, %v1416
        %v1418 = vrot.slane %v1417, 2
        %v1419 = vadd.f32 %v1417, %v1418
        %v1420 = vrot.slane %v1419, 1
        %v1421 = vadd.f32 %v1419, %v1420
        %v1422 = vmul.f32 %v1421, 0.015625
        %v1423 = vsub.f32 %v1385, %v1422
        %v1424 = vsub.f32 %v1386, %v1422
        %v1425 = vsub.f32 %v1387, %v1422
        %v1426 = vsub.f32 %v1388, %v1422
        %v1427 = vsub.f32 %v1389, %v1422
        %v1428 = vsub.f32 %v1390, %v1422
        %v1429 = vsub.f32 %v1391, %v1422
        %v1430 = vsub.f32 %v1392, %v1422
        %v1431 = vmul.f32 %v1423, %v1423
        %v1432 = vmul.f32 %v1424, %v1424
        %v1433 = vmul.f32 %v1425, %v1425
        %v1434 = vmul.f32 %v1426, %v1426
        %v1435 = vmul.f32 %v1427, %v1427
        %v1436 = vmul.f32 %v1428, %v1428
        %v1437 = vmul.f32 %v1429, %v1429
        %v1438 = vmul.f32 %v1430, %v1430
        %v1439 = vadd.f32 %v1431, %v1432
        %v1440 = vadd.f32 %v1439, %v1433
        %v1441 = vadd.f32 %v1440, %v1434
        %v1442 = vadd.f32 %v1441, %v1435
        %v1443 = vadd.f32 %v1442, %v1436
        %v1444 = vadd.f32 %v1443, %v1437
        %v1445 = vadd.f32 %v1444, %v1438
        %v1446 = vrot.slane %v1445, 4
        %v1447 = vadd.f32 %v1445, %v1446
        %v1448 = vrot.slane %v1447, 2
        %v1449 = vadd.f32 %v1447, %v1448
        %v1450 = vrot.slane %v1449, 1
        %v1451 = vadd.f32 %v1449, %v1450
        %vm1452 = vcmask 1040384
        %v1453 = vsel %vm1452, %v1421, %v1451
        %1454 = vst [vmem:[%s241] sm:$0x3] %v1453
      $region36: #{residual_block_3d.5} parent=27 // pred_fallthru
        _
      %p1455 = scmp.lt.s32.totalorder %s20, 1
      %s1456 = scalar_select %p1455, %s20, 1
      %p1457 = scmp.lt.s32.totalorder %s21, 7
      %s1458 = scalar_select %p1457, %s21, 7
      %s1459 = smul.addr %s1458, 8
      %s1460 = smul.addr %s1456, 64
      %s1461 = sadd.s32 %s1459, %s1460
      %s1462 = smul.addr %s1461, 4
      %s1463 = scalar_lea.vmem %s2, %s1462
      %p1464 = scmp.lt.s32.totalorder %s20, 1
      %s1465 = scalar_select %p1464, %s20, 1
      %p1466 = scmp.lt.s32.totalorder %s21, 7
      %s1467 = scalar_select %p1466, %s21, 7
      %s1468 = smul.addr %s1465, 8
      %s1469 = sadd.s32 %s1467, %s1468
      %s1470 = smul.addr %s1469, 2
      %s1471 = scalar_lea.vmem %s3, %s1470
      // Predicated region
      $region37: #{residual_block_3d.5} parent=27 // pred_check
        %p1472 = pneg %p105
      $region38: #{residual_block_3d.5} parent=27 // pred_check_branch
        %1474 = sbr.rel (%p1472) target = $region40
      $region39: #{residual_block_3d.5} parent=27 // pred_region
        _
      $region40: #{residual_block_3d.5} parent=27 // pred_fallthru
        _
      // Predicated region
      $region41: #{residual_block_3d.5} parent=27 // pred_check
        %p1475 = pneg %p133
      $region42: #{residual_block_3d.5} parent=27 // pred_check_branch
        %1477 = sbr.rel (%p1475) target = $region44
      $region43: #{residual_block_3d.5} parent=27 // pred_region
        _
      $region44: #{residual_block_3d.5} parent=27 // pred_fallthru
        _
    $region28: #{residual_block_3d.5} parent=5 // pred_fallthru
      _
    %p1478 = scmp.le.s32.totalorder 2, %s10
    // Predicated region
    $region45: #{residual_block_3d.5} parent=5 // pred_check
      %p1479 = pneg %p1478
    $region46: #{residual_block_3d.5} parent=5 // pred_check_branch
      %1481 = sbr.rel (%p1479) target = $region48
    $region47: #{residual_block_3d.5} parent=5 // pred_region
      %s1482 = ssub.s32 %s10, 2
      // Predicated region
      $region49: #{residual_block_3d.5} parent=47 // pred_check
        %p1483 = pneg %p111
      $region50: #{residual_block_3d.5} parent=47 // pred_check_branch
        %1485 = sbr.rel (%p1483) target = $region52
      $region51: #{residual_block_3d.5} parent=47 // pred_region
        %p1486 = scmp.lt.s32.totalorder %s23, 1
        %s1487 = scalar_select %p1486, %s23, 1
        %p1488 = scmp.lt.s32.totalorder %s24, 7
        %s1489 = scalar_select %p1488, %s24, 7
        %s1490 = smul.addr %s1489, 8
        %s1491 = smul.addr %s1487, 64
        %s1492 = sadd.s32 %s1490, %s1491
        %s1493 = smul.addr %s1492, 4
        %s1494 = scalar_lea.vmem %s2, %s1493
      $region52: #{residual_block_3d.5} parent=47 // pred_fallthru
        _
      // Predicated region
      $region53: #{residual_block_3d.5} parent=47 // pred_check
        %p1495 = pneg %p139
      $region54: #{residual_block_3d.5} parent=47 // pred_check_branch
        %1497 = sbr.rel (%p1495) target = $region56
      $region55: #{residual_block_3d.5} parent=47 // pred_region
        %p1498 = scmp.lt.s32.totalorder %s23, 1
        %s1499 = scalar_select %p1498, %s23, 1
        %p1500 = scmp.lt.s32.totalorder %s24, 7
        %s1501 = scalar_select %p1500, %s24, 7
        %s1502 = smul.addr %s1499, 8
        %s1503 = sadd.s32 %s1501, %s1502
        %s1504 = smul.addr %s1503, 2
        %s1505 = scalar_lea.vmem %s3, %s1504
      $region56: #{residual_block_3d.5} parent=47 // pred_fallthru
        _
    $region48: #{residual_block_3d.5} parent=5 // pred_fallthru
      _
  $region6: #{residual_block_3d.5} parent=0 // loop_footer
    %s14 = sadd.s32 1, %s10
  $region7: #{residual_block_3d.5} parent=0 // loop_footer_branch
    %9 = sbr.rel target = $region3
  $region8: #{residual_block_3d.5} parent=0 // loop_exit
    _

</llo_original>
